<compile_context>
chip_gen: v7x
topology: tpu7x:2x2x1
jax: 0.10.0
libtpu: 0.0.40
codegen_flags: <defaults>
</compile_context>

<pallas_src>
import functools

import jax
import jax.numpy as jnp
from jax import lax
from jax.experimental import pallas as pl
from jax.experimental.pallas import tpu as pltpu


def _elu(x):
    # torch.nn.ELU(alpha=1.0); clamp the exp argument so the unselected branch
    # cannot overflow to inf.
    return jnp.where(x > 0, x, jnp.exp(jnp.minimum(x, 0.0)) - 1.0)


def _pick_tile(n, target, multiple=8):
    """Largest t <= target with t % multiple == 0 and n % t == 0.

    Falls back to n itself (a full-extent block is always a legal block shape).
    """
    if n <= target:
        return n
    t = (target // multiple) * multiple
    while t >= multiple:
        if n % t == 0:
            return t
        t -= multiple
    return n


# --------------------------------------------------------------------------
# Kernel 1: Contrast.proj (Linear -> ELU -> Linear) + L2 row-normalisation
# for BOTH views of one row block.  1/sqrt(tau) is folded into every row so
# the downstream similarity matmul directly yields cos(zs, zp) / tau.
# --------------------------------------------------------------------------
def proj_norm_kernel(zs_ref, zp_ref, w1_ref, b1_ref, w2_ref, b2_ref,
                     zns_ref, znp_ref, *, inv_sqrt_tau):
    w1 = w1_ref[...]
    b1 = b1_ref[...]
    w2 = w2_ref[...]
    b2 = b2_ref[...]

    def proj(x):                                                   # (tm, H) bf16
        h = jnp.dot(x, w1, preferred_element_type=jnp.float32) + b1
        h = _elu(h)
        y = jnp.dot(h.astype(jnp.bfloat16), w2,
                    preferred_element_type=jnp.float32) + b2
        inv = lax.rsqrt(jnp.sum(y * y, axis=-1, keepdims=True) + 1e-12) * inv_sqrt_tau
        return (y * inv).astype(jnp.bfloat16)

    zns_ref[...] = proj(zs_ref[...])
    znp_ref[...] = proj(zp_ref[...])


# --------------------------------------------------------------------------
# Kernel 2: blocked contrastive loss + fused predict head.
#   grid = (query-row blocks [parallel], key blocks [arbitrary])
# Per-query-row sums of the unnormalised similarities (total and positive-
# masked) accumulate in VMEM scratch across the key axis; per-row -log(p) is
# written on the last key step, the predict matmul on the first key step.
# --------------------------------------------------------------------------
def contrast_predict_kernel(zsq_ref, zpq_ref, zsk_ref, zpk_ref, pos_ref,
                            zscb_ref, wp_ref, bp_ref,
                            nls_ref, nlp_ref, pred_ref,
                            row_sc, pos_sc, row_pg, pos_pg):
    kj = pl.program_id(1)

    @pl.when(kj == 0)
    def _():
        row_sc[...] = jnp.zeros_like(row_sc)
        pos_sc[...] = jnp.zeros_like(pos_sc)
        row_pg[...] = jnp.zeros_like(row_pg)
        pos_pg[...] = jnp.zeros_like(pos_pg)
        # Fused predict head (inputs are resident from step 0); its MXU work and
        # store overlap with the remaining key-block DMAs.
        pred_ref[...] = (jnp.dot(zscb_ref[...], wp_ref[...],
                                 preferred_element_type=jnp.float32) + bp_ref[...])

    # Contract the last (feature) dims of both operands: X @ Y.T with no
    # explicit transpose (keeps the key blocks off the XLU).
    dn = (((1,), (1,)), ((), ()))
    # f32 exp (safe on v5e; arguments bounded by +-1/tau so no overflow).
    s_sc = jnp.exp(lax.dot_general(zsq_ref[...], zpk_ref[...], dn,
                                   preferred_element_type=jnp.float32))   # (tb, tk)
    s_pg = jnp.exp(lax.dot_general(zpq_ref[...], zsk_ref[...], dn,
                                   preferred_element_type=jnp.float32))   # (tb, tk)
    m = pos_ref[...].astype(jnp.float32)                                  # int8 -> f32

    row_sc[...] += jnp.sum(s_sc, axis=1, keepdims=True)
    pos_sc[...] += jnp.sum(s_sc * m, axis=1, keepdims=True)
    row_pg[...] += jnp.sum(s_pg, axis=1, keepdims=True)
    pos_pg[...] += jnp.sum(s_pg * m, axis=1, keepdims=True)

    @pl.when(kj == pl.num_programs(1) - 1)
    def _():
        # Exact divide (once per query block) -> better match to the reference
        # than an approximate reciprocal feeding log().
        p_sc = pos_sc[...] / (row_sc[...] + 1e-8)
        p_pg = pos_pg[...] / (row_pg[...] + 1e-8)
        nls_ref[...] = -jnp.log(p_sc + 1e-8)
        nlp_ref[...] = -jnp.log(p_pg + 1e-8)


def rhco_forward(z_sc, z_pg, pos, params, *, tau, lambda_):
    """Returns (contrastive loss scalar, predictions for the first B target nodes)."""
    N, H = z_sc.shape
    B = pos.shape[0]
    out_dim = params["wp"].shape[1]
    out_pad = pl.cdiv(out_dim, 128) * 128            # lane-dense predict output

    # bf16 copies of all matmul operands (native MXU width, half the DMA bytes);
    # biases and all elementwise math stay in f32.  pos streams as int8.
    zs16 = z_sc.astype(jnp.bfloat16)
    zp16 = z_pg.astype(jnp.bfloat16)
    w1 = params["w1"].astype(jnp.bfloat16)
    w2 = params["w2"].astype(jnp.bfloat16)
    wp = jnp.zeros((H, out_pad), jnp.bfloat16).at[:, :out_dim].set(
        params["wp"].astype(jnp.bfloat16))
    bp = jnp.zeros((1, out_pad), jnp.float32).at[:, :out_dim].set(params["bp"])
    pos_i8 = pos.astype(jnp.int8)

    # ---- kernel 1: projection MLP + normalisation for both views, row-tiled ----
    tm = _pick_tile(N, 512, 8)
    zn_sc, zn_pg = pl.pallas_call(
        functools.partial(proj_norm_kernel, inv_sqrt_tau=float(1.0 / (tau ** 0.5))),
        out_shape=(jax.ShapeDtypeStruct((N, H), jnp.bfloat16),
                   jax.ShapeDtypeStruct((N, H), jnp.bfloat16)),
        grid=(N // tm,),
        in_specs=[
            pl.BlockSpec((tm, H), lambda i: (i, 0)),    # z_sc row block
            pl.BlockSpec((tm, H), lambda i: (i, 0)),    # z_pg row block
            pl.BlockSpec((H, H), lambda i: (0, 0)),     # w1
            pl.BlockSpec((1, H), lambda i: (0, 0)),     # b1
            pl.BlockSpec((H, H), lambda i: (0, 0)),     # w2
            pl.BlockSpec((1, H), lambda i: (0, 0)),     # b2
        ],
        out_specs=(pl.BlockSpec((tm, H), lambda i: (i, 0)),
                   pl.BlockSpec((tm, H), lambda i: (i, 0))),
        compiler_params=pltpu.CompilerParams(dimension_semantics=("parallel",)),
    )(zs16, zp16, w1, params["b1"], w2, params["b2"])

    # ---- kernel 2: contrast loss (query-parallel x key-arbitrary) + predict ----
    tb = _pick_tile(B, 128, 8)      # query-row block
    tk = _pick_tile(N, 512, 128)    # key block (multiple of 128 so the pos mask
                                    # block is lane-dense)
    n_qb, n_kb = B // tb, N // tk

    nls, nlp, pred_pad = pl.pallas_call(
        contrast_predict_kernel,
        out_shape=(jax.ShapeDtypeStruct((B, 1), jnp.float32),        # -log p_sc per row
                   jax.ShapeDtypeStruct((B, 1), jnp.float32),        # -log p_pg per row
                   jax.ShapeDtypeStruct((B, out_pad), jnp.float32)), # predictions (padded)
        grid=(n_qb, n_kb),
        in_specs=[
            pl.BlockSpec((tb, H), lambda qi, kj: (qi, 0)),     # zn_sc query rows
            pl.BlockSpec((tb, H), lambda qi, kj: (qi, 0)),     # zn_pg query rows
            pl.BlockSpec((tk, H), lambda qi, kj: (kj, 0)),     # zn_sc key block
            pl.BlockSpec((tk, H), lambda qi, kj: (kj, 0)),     # zn_pg key block
            pl.BlockSpec((tb, tk), lambda qi, kj: (qi, kj)),   # pos mask (int8)
            pl.BlockSpec((tb, H), lambda qi, kj: (qi, 0)),     # raw z_sc rows (predict)
            pl.BlockSpec((H, out_pad), lambda qi, kj: (0, 0)),
            pl.BlockSpec((1, out_pad), lambda qi, kj: (0, 0)),
        ],
        out_specs=(pl.BlockSpec((tb, 1), lambda qi, kj: (qi, 0)),
                   pl.BlockSpec((tb, 1), lambda qi, kj: (qi, 0)),
                   pl.BlockSpec((tb, out_pad), lambda qi, kj: (qi, 0))),
        scratch_shapes=[
            pltpu.VMEM((tb, 1), jnp.float32),   # row_sum_sc
            pltpu.VMEM((tb, 1), jnp.float32),   # pos_sum_sc
            pltpu.VMEM((tb, 1), jnp.float32),   # row_sum_pg
            pltpu.VMEM((tb, 1), jnp.float32),   # pos_sum_pg
        ],
        compiler_params=pltpu.CompilerParams(
            dimension_semantics=("parallel", "arbitrary")),
    )(zn_sc, zn_pg, zn_sc, zn_pg, pos_i8, zs16, wp, bp)

    loss_sc = jnp.mean(nls)
    loss_pg = jnp.mean(nlp)
    loss = lambda_ * loss_sc + (1.0 - lambda_) * loss_pg
    return loss, pred_pad[:, :out_dim]


def init_params(key, hidden_dim, out_dim):
    """Deterministic synthetic parameters (xavier-normal-like, relu gain)."""
    k1, k2, k3 = jax.random.split(key, 3)
    gain = jnp.sqrt(2.0)
    xav = lambda k, fi, fo: (gain * jnp.sqrt(2.0 / (fi + fo))
                             * jax.random.normal(k, (fi, fo), jnp.float32))
    return {
        # Contrast.proj = Linear(H,H) -> ELU -> Linear(H,H); weights stored
        # pre-transposed so the kernels compute y = x @ W + b.
        "w1": xav(k1, hidden_dim, hidden_dim),
        "b1": jnp.zeros((1, hidden_dim), jnp.float32),
        "w2": xav(k2, hidden_dim, hidden_dim),
        "b2": jnp.zeros((1, hidden_dim), jnp.float32),
        # self.predict = Linear(hidden_dim, out_dim), xavier_normal_(gain=relu)
        "wp": xav(k3, hidden_dim, out_dim),
        "bp": jnp.zeros((1, out_dim), jnp.float32),
    }


def _reference(z_sc, z_pg, pos, params, tau, lambda_):
    """Pure-JAX f32 reference of the Contrast + predict semantics."""
    def proj(z):
        h = jax.nn.elu(z @ params["w1"] + params["b1"])
        return h @ params["w2"] + params["b2"]

    zs = proj(z_sc)
    zp = proj(z_pg)
    zs = zs / jnp.linalg.norm(zs, axis=1, keepdims=True)
    zp = zp / jnp.linalg.norm(zp, axis=1, keepdims=True)
    B = pos.shape[0]
    sim_sc = jnp.exp(zs[:B] @ zp.T / tau)          # (B, N)
    sim_pg = jnp.exp(zp[:B] @ zs.T / tau)          # (B, N)
    p_sc = (sim_sc * pos).sum(1) / sim_sc.sum(1)
    p_pg = (sim_pg * pos).sum(1) / sim_pg.sum(1)
    loss = (lambda_ * (-jnp.log(p_sc)).mean()
            + (1.0 - lambda_) * (-jnp.log(p_pg)).mean())
    pred = z_sc[:B] @ params["wp"] + params["bp"]
    return loss, pred


if __name__ == "__main__":
    key = jax.random.PRNGKey(0)
    N, H, B, OUT = 256, 128, 128, 64     # target+positive nodes, hidden, batch, out_dim
    TAU, LAMBDA = 0.8, 0.5

    k_sc, k_pg, k_pos, k_par = jax.random.split(key, 4)

    # TODO(synk): RHGNN (sc_encoder) and PositiveGraphEncoder (pg_encoder) are DGL
    # sparse heterogeneous message-passing modules over `blocks`/`mgs`; they have no
    # dense Pallas equivalent, so their output embeddings are synthesised as inputs.
    z_sc = jax.random.normal(k_sc, (N, H), jnp.float32)   # structure-view embeddings
    z_pg = jax.random.normal(k_pg, (N, H), jnp.float32)   # positive-graph-view embeddings

    # pos: (B, N) positive-sample indicator; every target node is its own positive.
    pos = jnp.zeros((B, N), jnp.float32)
    pos = pos.at[jnp.arange(B), jnp.arange(B)].set(1.0)
    pos = jnp.maximum(
        pos, (jax.random.uniform(k_pos, (B, N)) < 0.05).astype(jnp.float32))

    params = init_params(k_par, H, OUT)

    loss, out = rhco_forward(z_sc, z_pg, pos, params, tau=TAU, lambda_=LAMBDA)
    jax.block_until_ready((loss, out))
    assert out.shape == (B, OUT)
    assert bool(jnp.isfinite(loss))
    assert bool(jnp.all(jnp.isfinite(out)))

    # Loose-tolerance check against an f32 reference (kernel uses bf16 MXU operands).
    ref_loss, ref_out = _reference(z_sc, z_pg, pos, params, TAU, LAMBDA)
    assert bool(jnp.allclose(loss, ref_loss, rtol=1e-1, atol=1e-1))
    assert bool(jnp.allclose(out, ref_out, rtol=1e-1, atol=1e-1))
    print("KERNEL_OK")
</pallas_src>

<mosaic_0001>
module attributes {stable_mosaic.version = 11 : i64} {
  func.func @proj_norm_kernel(%arg0: i32, %arg1: memref<256x128xbf16, #tpu.memory_space<vmem>>, %arg2: memref<256x128xbf16, #tpu.memory_space<vmem>>, %arg3: memref<128x128xbf16, #tpu.memory_space<vmem>>, %arg4: memref<1x128xf32, #tpu.memory_space<vmem>>, %arg5: memref<128x128xbf16, #tpu.memory_space<vmem>>, %arg6: memref<1x128xf32, #tpu.memory_space<vmem>>, %arg7: memref<256x128xbf16, #tpu.memory_space<vmem>>, %arg8: memref<256x128xbf16, #tpu.memory_space<vmem>>) attributes {dimension_semantics = [#tpu.dimension_semantics<parallel>], iteration_bounds = array<i64: 1>, scalar_prefetch = 0 : i64, scratch_operands = 0 : i64, tpu.core_type = #tpu.core_type<tc>, window_params = [{transform_indices = @transform_0, window_bounds = array<i64: 256, 128>}, {transform_indices = @transform_1, window_bounds = array<i64: 256, 128>}, {pipeline_mode = #tpu.pipeline_mode<synchronous>, transform_indices = @transform_2, window_bounds = array<i64: 128, 128>}, {pipeline_mode = #tpu.pipeline_mode<synchronous>, transform_indices = @transform_3, window_bounds = array<i64: 1, 128>}, {pipeline_mode = #tpu.pipeline_mode<synchronous>, transform_indices = @transform_4, window_bounds = array<i64: 128, 128>}, {pipeline_mode = #tpu.pipeline_mode<synchronous>, transform_indices = @transform_5, window_bounds = array<i64: 1, 128>}, {transform_indices = @transform_6, window_bounds = array<i64: 256, 128>}, {transform_indices = @transform_7, window_bounds = array<i64: 256, 128>}]} {
    %c0 = arith.constant 0 : index
    %c0_0 = arith.constant 0 : index
    %0 = vector.load %arg3[%c0, %c0_0] : memref<128x128xbf16, #tpu.memory_space<vmem>>, vector<128x128xbf16>
    %c0_1 = arith.constant 0 : index
    %c0_2 = arith.constant 0 : index
    %1 = vector.load %arg4[%c0_1, %c0_2] : memref<1x128xf32, #tpu.memory_space<vmem>>, vector<1x128xf32>
    %c0_3 = arith.constant 0 : index
    %c0_4 = arith.constant 0 : index
    %2 = vector.load %arg5[%c0_3, %c0_4] : memref<128x128xbf16, #tpu.memory_space<vmem>>, vector<128x128xbf16>
    %c0_5 = arith.constant 0 : index
    %c0_6 = arith.constant 0 : index
    %3 = vector.load %arg6[%c0_5, %c0_6] : memref<1x128xf32, #tpu.memory_space<vmem>>, vector<1x128xf32>
    %c0_7 = arith.constant 0 : index
    %c0_8 = arith.constant 0 : index
    %4 = vector.load %arg1[%c0_7, %c0_8] : memref<256x128xbf16, #tpu.memory_space<vmem>>, vector<256x128xbf16>
    %cst = arith.constant dense<0.000000e+00> : vector<256x128xf32>
    %5 = tpu.matmul %4, %0, %cst {dimension_numbers = #tpu.dot_dimension_numbers<[1], [0], [0], [1], [0, 0, 1, 1], [], []>} : vector<256x128xbf16>, vector<128x128xbf16>, vector<256x128xf32> -> vector<256x128xf32>
    %6 = vector.broadcast %1 : vector<1x128xf32> to vector<256x128xf32>
    %7 = arith.addf %5, %6 : vector<256x128xf32>
    %cst_9 = arith.constant 0.000000e+00 : f32
    %8 = vector.broadcast %cst_9 : f32 to vector<256x128xf32>
    %9 = arith.cmpf ogt, %7, %8 : vector<256x128xf32>
    %cst_10 = arith.constant 0.000000e+00 : f32
    %10 = vector.broadcast %cst_10 : f32 to vector<256x128xf32>
    %11 = arith.minimumf %7, %10 : vector<256x128xf32>
    %12 = math.exp %11 : vector<256x128xf32>
    %cst_11 = arith.constant 1.000000e+00 : f32
    %13 = vector.broadcast %cst_11 : f32 to vector<256x128xf32>
    %14 = arith.subf %12, %13 : vector<256x128xf32>
    %15 = arith.select %9, %7, %14 : vector<256x128xi1>, vector<256x128xf32>
    %16 = arith.truncf %15 : vector<256x128xf32> to vector<256x128xbf16>
    %cst_12 = arith.constant dense<0.000000e+00> : vector<256x128xf32>
    %17 = tpu.matmul %16, %2, %cst_12 {dimension_numbers = #tpu.dot_dimension_numbers<[1], [0], [0], [1], [0, 0, 1, 1], [], []>} : vector<256x128xbf16>, vector<128x128xbf16>, vector<256x128xf32> -> vector<256x128xf32>
    %18 = vector.broadcast %3 : vector<1x128xf32> to vector<256x128xf32>
    %19 = arith.addf %17, %18 : vector<256x128xf32>
    %20 = arith.mulf %19, %19 : vector<256x128xf32>
    %cst_13 = arith.constant dense<0.000000e+00> : vector<256xf32>
    %21 = vector.multi_reduction <add>, %20, %cst_13 [1] : vector<256x128xf32> to vector<256xf32>
    %22 = vector.shape_cast %21 : vector<256xf32> to vector<256x1xf32>
    %cst_14 = arith.constant 9.99999996E-13 : f32
    %23 = vector.broadcast %cst_14 : f32 to vector<256x1xf32>
    %24 = arith.addf %22, %23 : vector<256x1xf32>
    %25 = math.rsqrt %24 : vector<256x1xf32>
    %cst_15 = arith.constant 1.11803401 : f32
    %26 = vector.broadcast %cst_15 : f32 to vector<256x1xf32>
    %27 = arith.mulf %25, %26 : vector<256x1xf32>
    %28 = vector.broadcast %27 : vector<256x1xf32> to vector<256x128xf32>
    %29 = arith.mulf %19, %28 : vector<256x128xf32>
    %30 = arith.truncf %29 : vector<256x128xf32> to vector<256x128xbf16>
    %c0_16 = arith.constant 0 : index
    %c0_17 = arith.constant 0 : index
    %31 = vector.load %arg7[%c0_16, %c0_17] : memref<256x128xbf16, #tpu.memory_space<vmem>>, vector<256x128xbf16>
    tpu.vector_store %arg7[%c0_16, %c0_17], %30 {strides = array<i32>} : memref<256x128xbf16, #tpu.memory_space<vmem>>, vector<256x128xbf16>,
    %c0_18 = arith.constant 0 : index
    %c0_19 = arith.constant 0 : index
    %32 = vector.load %arg2[%c0_18, %c0_19] : memref<256x128xbf16, #tpu.memory_space<vmem>>, vector<256x128xbf16>
    %cst_20 = arith.constant dense<0.000000e+00> : vector<256x128xf32>
    %33 = tpu.matmul %32, %0, %cst_20 {dimension_numbers = #tpu.dot_dimension_numbers<[1], [0], [0], [1], [0, 0, 1, 1], [], []>} : vector<256x128xbf16>, vector<128x128xbf16>, vector<256x128xf32> -> vector<256x128xf32>
    %34 = vector.broadcast %1 : vector<1x128xf32> to vector<256x128xf32>
    %35 = arith.addf %33, %34 : vector<256x128xf32>
    %cst_21 = arith.constant 0.000000e+00 : f32
    %36 = vector.broadcast %cst_21 : f32 to vector<256x128xf32>
    %37 = arith.cmpf ogt, %35, %36 : vector<256x128xf32>
    %cst_22 = arith.constant 0.000000e+00 : f32
    %38 = vector.broadcast %cst_22 : f32 to vector<256x128xf32>
    %39 = arith.minimumf %35, %38 : vector<256x128xf32>
    %40 = math.exp %39 : vector<256x128xf32>
    %cst_23 = arith.constant 1.000000e+00 : f32
    %41 = vector.broadcast %cst_23 : f32 to vector<256x128xf32>
    %42 = arith.subf %40, %41 : vector<256x128xf32>
    %43 = arith.select %37, %35, %42 : vector<256x128xi1>, vector<256x128xf32>
    %44 = arith.truncf %43 : vector<256x128xf32> to vector<256x128xbf16>
    %cst_24 = arith.constant dense<0.000000e+00> : vector<256x128xf32>
    %45 = tpu.matmul %44, %2, %cst_24 {dimension_numbers = #tpu.dot_dimension_numbers<[1], [0], [0], [1], [0, 0, 1, 1], [], []>} : vector<256x128xbf16>, vector<128x128xbf16>, vector<256x128xf32> -> vector<256x128xf32>
    %46 = vector.broadcast %3 : vector<1x128xf32> to vector<256x128xf32>
    %47 = arith.addf %45, %46 : vector<256x128xf32>
    %48 = arith.mulf %47, %47 : vector<256x128xf32>
    %cst_25 = arith.constant dense<0.000000e+00> : vector<256xf32>
    %49 = vector.multi_reduction <add>, %48, %cst_25 [1] : vector<256x128xf32> to vector<256xf32>
    %50 = vector.shape_cast %49 : vector<256xf32> to vector<256x1xf32>
    %cst_26 = arith.constant 9.99999996E-13 : f32
    %51 = vector.broadcast %cst_26 : f32 to vector<256x1xf32>
    %52 = arith.addf %50, %51 : vector<256x1xf32>
    %53 = math.rsqrt %52 : vector<256x1xf32>
    %cst_27 = arith.constant 1.11803401 : f32
    %54 = vector.broadcast %cst_27 : f32 to vector<256x1xf32>
    %55 = arith.mulf %53, %54 : vector<256x1xf32>
    %56 = vector.broadcast %55 : vector<256x1xf32> to vector<256x128xf32>
    %57 = arith.mulf %47, %56 : vector<256x128xf32>
    %58 = arith.truncf %57 : vector<256x128xf32> to vector<256x128xbf16>
    %c0_28 = arith.constant 0 : index
    %c0_29 = arith.constant 0 : index
    %59 = vector.load %arg8[%c0_28, %c0_29] : memref<256x128xbf16, #tpu.memory_space<vmem>>, vector<256x128xbf16>
    tpu.vector_store %arg8[%c0_28, %c0_29], %58 {strides = array<i32>} : memref<256x128xbf16, #tpu.memory_space<vmem>>, vector<256x128xbf16>,
    return
  }
  func.func @transform_0(%arg0: i32) -> (i32, i32) {
    %c0_i32 = arith.constant 0 : i32
    %c0_i32_0 = arith.constant 0 : i32
    return %arg0, %c0_i32 : i32, i32
  }
  func.func @transform_1(%arg0: i32) -> (i32, i32) {
    %c0_i32 = arith.constant 0 : i32
    %c0_i32_0 = arith.constant 0 : i32
    return %arg0, %c0_i32 : i32, i32
  }
  func.func @transform_2(%arg0: i32) -> (i32, i32) {
    %c0_i32 = arith.constant 0 : i32
    %c0_i32_0 = arith.constant 0 : i32
    %c0_i32_1 = arith.constant 0 : i32
    return %c0_i32, %c0_i32_0 : i32, i32
  }
  func.func @transform_3(%arg0: i32) -> (i32, i32) {
    %c0_i32 = arith.constant 0 : i32
    %c0_i32_0 = arith.constant 0 : i32
    %c0_i32_1 = arith.constant 0 : i32
    return %c0_i32, %c0_i32_0 : i32, i32
  }
  func.func @transform_4(%arg0: i32) -> (i32, i32) {
    %c0_i32 = arith.constant 0 : i32
    %c0_i32_0 = arith.constant 0 : i32
    %c0_i32_1 = arith.constant 0 : i32
    return %c0_i32, %c0_i32_0 : i32, i32
  }
  func.func @transform_5(%arg0: i32) -> (i32, i32) {
    %c0_i32 = arith.constant 0 : i32
    %c0_i32_0 = arith.constant 0 : i32
    %c0_i32_1 = arith.constant 0 : i32
    return %c0_i32, %c0_i32_0 : i32, i32
  }
  func.func @transform_6(%arg0: i32) -> (i32, i32) {
    %c0_i32 = arith.constant 0 : i32
    %c0_i32_0 = arith.constant 0 : i32
    return %arg0, %c0_i32 : i32, i32
  }
  func.func @transform_7(%arg0: i32) -> (i32, i32) {
    %c0_i32 = arith.constant 0 : i32
    %c0_i32_0 = arith.constant 0 : i32
    return %arg0, %c0_i32 : i32, i32
  }
}

</mosaic_0001>

<llo_original>
// kernel: tpu_custom_call.1
$region0: #{tpu_custom_call.1}
  #allocation0 [shape = 'u32[]', space=smem, size = 0x4, offset = 0x4, fixed_abs, tag = 'smem constant byte address 0x4 - core index']
  #allocation1 [shape = 'u32[144,128]{1,0:T(1,128)}', space=vmem, size = 0x12000, scoped, tag = 'internal scratch']
  %s0 = inlined_call_operand.hbm [shape: bf16[256,128], index: 0, kind: input, shape index: {}]
  %s1 = inlined_call_operand.hbm [shape: bf16[256,128], index: 1, kind: input, shape index: {}]
  %s2 = inlined_call_operand.hbm [shape: bf16[128,128], index: 2, kind: input, shape index: {}]
  %s3 = inlined_call_operand.vmem [shape: f32[1,128], index: 3, kind: input, shape index: {}]
  %s4 = inlined_call_operand.hbm [shape: bf16[128,128], index: 4, kind: input, shape index: {}]
  %s5 = inlined_call_operand.vmem [shape: f32[1,128], index: 5, kind: input, shape index: {}]
  %s6 = inlined_call_operand.hbm [shape: bf16[256,128], index: 6, kind: output, shape index: {0}]
  %s7 = inlined_call_operand.hbm [shape: bf16[256,128], index: 7, kind: output, shape index: {1}]
  %8 = xla_tuple %s6, %s7
  %s9 = sld [smem:[#allocation0]]
  $region58: #{tpu_custom_call.1} parent=0
    _
  %s11 = ssub.s32 1, %s9
  %s12 = scalar_select 0, %s11, %s9
  $region1: #{tpu_custom_call.1} parent=0
    #allocation2 [shape = 'u8[65536]{0}', space=vmem, size = 0x10000, scoped, tag = 'input window, operand 0, single buffered']
    #allocation3 [shape = 's32[1]{0}', space=sflag, size = 0x4, scoped, tag = 'scoped memory for tpu_custom_call.1']
    #allocation4 [shape = 's32[1]{0}', space=sflag, size = 0x4, scoped, tag = 'scoped memory for tpu_custom_call.1']
    #allocation5 [shape = 'u8[65536]{0}', space=vmem, size = 0x10000, scoped, tag = 'input window, operand 1, single buffered']
    #allocation6 [shape = 's32[1]{0}', space=sflag, size = 0x4, scoped, tag = 'scoped memory for tpu_custom_call.1']
    #allocation7 [shape = 'u8[32768]{0}', space=vmem, size = 0x8000, scoped, tag = 'input window, operand 2, single buffered']
    #allocation8 [shape = 'u8[32768]{0}', space=vmem, size = 0x8000, scoped, tag = 'input window, operand 4, single buffered']
    #allocation9 [shape = 's32[1]{0}', space=sflag, size = 0x4, scoped, tag = 'scoped memory for tpu_custom_call.1']
    #allocation10 [shape = 'u8[65536]{0}', space=vmem, size = 0x10000, scoped, tag = 'output window, operand 0, single buffered']
    #allocation11 [shape = 'u8[65536]{0}', space=vmem, size = 0x10000, scoped, tag = 'output window, operand 1, single buffered']
    #allocation12 [shape = 's32[1]{0}', space=sflag, size = 0x4, scoped, tag = 'scoped memory for tpu_custom_call.1']
    %13 = vsyncpa [#allocation3], 0
    %14 = vsyncpa [#allocation6], 0
    %15 = vsyncpa [#allocation9], 0
    %16 = vsyncpa [#allocation4], 0
    %17 = vsyncpa [#allocation12], 0
    // Predicated region
    $region2: #{tpu_custom_call.1} parent=1 // pred_check
      _
    $region3: #{tpu_custom_call.1} parent=1 // pred_check_branch
      %19 = sbr.rel (0) target = $region5
    $region4: #{tpu_custom_call.1} parent=1 // pred_region
      %s21 = ssub.s32 2048, 2048
      %22 = vsyncadd [#allocation3], %s21
      %s23 = sshll.u32 [#allocation2], 4
      %s24 = int_to_ptr.vmem [resolvable:$true] %s23
      %29 = dma.hbm_to_vmem [thread:$0]  %s0, 2048, %s24, [#allocation3], 64, 64, 4
    $region5: #{tpu_custom_call.1} parent=1 // pred_fallthru
      _
    // Predicated region
    $region6: #{tpu_custom_call.1} parent=1 // pred_check
      _
    $region7: #{tpu_custom_call.1} parent=1 // pred_check_branch
      %31 = sbr.rel (0) target = $region9
    $region8: #{tpu_custom_call.1} parent=1 // pred_region
      %s33 = ssub.s32 2048, 2048
      %34 = vsyncadd [#allocation6], %s33
      %s35 = sshll.u32 [#allocation5], 4
      %s36 = int_to_ptr.vmem [resolvable:$true] %s35
      %41 = dma.hbm_to_vmem [thread:$0]  %s1, 2048, %s36, [#allocation6], 64, 64, 4
    $region9: #{tpu_custom_call.1} parent=1 // pred_fallthru
      _
    // Predicated region
    $region10: #{tpu_custom_call.1} parent=1 // pred_check
      _
    $region11: #{tpu_custom_call.1} parent=1 // pred_check_branch
      %43 = sbr.rel (0) target = $region13
    $region12: #{tpu_custom_call.1} parent=1 // pred_region
      %s45 = ssub.s32 1024, 1024
      %46 = vsyncadd [#allocation6], %s45
      %s47 = sshll.u32 [#allocation7], 4
      %s48 = int_to_ptr.vmem [resolvable:$true] %s47
      %53 = dma.hbm_to_vmem [thread:$0]  %s2, 1024, %s48, [#allocation6], 64, 64, 4
    $region13: #{tpu_custom_call.1} parent=1 // pred_fallthru
      _
    // Predicated region
    $region14: #{tpu_custom_call.1} parent=1 // pred_check
      _
    $region15: #{tpu_custom_call.1} parent=1 // pred_check_branch
      %55 = sbr.rel (0) target = $region17
    $region16: #{tpu_custom_call.1} parent=1 // pred_region
      _
    $region17: #{tpu_custom_call.1} parent=1 // pred_fallthru
      _
    // Predicated region
    $region18: #{tpu_custom_call.1} parent=1 // pred_check
      _
    $region19: #{tpu_custom_call.1} parent=1 // pred_check_branch
      %57 = sbr.rel (0) target = $region21
    $region20: #{tpu_custom_call.1} parent=1 // pred_region
      %s59 = ssub.s32 1024, 1024
      %60 = vsyncadd [#allocation9], %s59
      %s61 = sshll.u32 [#allocation8], 4
      %s62 = int_to_ptr.vmem [resolvable:$true] %s61
      %67 = dma.hbm_to_vmem [thread:$0]  %s4, 1024, %s62, [#allocation9], 64, 64, 4
    $region21: #{tpu_custom_call.1} parent=1 // pred_fallthru
      _
    // Predicated region
    $region22: #{tpu_custom_call.1} parent=1 // pred_check
      _
    $region23: #{tpu_custom_call.1} parent=1 // pred_check_branch
      %69 = sbr.rel (0) target = $region25
    $region24: #{tpu_custom_call.1} parent=1 // pred_region
      _
    $region25: #{tpu_custom_call.1} parent=1 // pred_fallthru
      _
    // Predicated region
    $region26: #{tpu_custom_call.1} parent=1 // pred_check
      _
    $region27: #{tpu_custom_call.1} parent=1 // pred_check_branch
      %71 = sbr.rel (0) target = $region29
    $region28: #{tpu_custom_call.1} parent=1 // pred_region
      %72 = dma.done [#allocation3], 2048
    $region29: #{tpu_custom_call.1} parent=1 // pred_fallthru
      _
    // Predicated region
    $region30: #{tpu_custom_call.1} parent=1 // pred_check
      _
    $region31: #{tpu_custom_call.1} parent=1 // pred_check_branch
      %74 = sbr.rel (0) target = $region33
    $region32: #{tpu_custom_call.1} parent=1 // pred_region
      %75 = dma.done [#allocation6], 2048
    $region33: #{tpu_custom_call.1} parent=1 // pred_fallthru
      _
    // Predicated region
    $region34: #{tpu_custom_call.1} parent=1 // pred_check
      _
    $region35: #{tpu_custom_call.1} parent=1 // pred_check_branch
      %77 = sbr.rel (0) target = $region37
    $region36: #{tpu_custom_call.1} parent=1 // pred_region
      %78 = dma.done [#allocation6], 1024
    $region37: #{tpu_custom_call.1} parent=1 // pred_fallthru
      _
    // Predicated region
    $region38: #{tpu_custom_call.1} parent=1 // pred_check
      _
    $region39: #{tpu_custom_call.1} parent=1 // pred_check_branch
      %80 = sbr.rel (0) target = $region41
    $region40: #{tpu_custom_call.1} parent=1 // pred_region
      %81 = dma.done [#allocation9], 1024
    $region41: #{tpu_custom_call.1} parent=1 // pred_fallthru
      _
    %v83 = vld [vmem:[#allocation7] sm:$0xf]
    %v84 = vld [vmem:[#allocation7 + $0x4] sm:$0xf]
    %v85 = vld [vmem:[#allocation7 + $0x8] sm:$0xf]
    %v86 = vld [vmem:[#allocation7 + $0xc] sm:$0xf]
    %v87 = vld [vmem:[#allocation7 + $0x10] sm:$0xf]
    %v88 = vld [vmem:[#allocation7 + $0x14] sm:$0xf]
    %v89 = vld [vmem:[#allocation7 + $0x18] sm:$0xf]
    %v90 = vld [vmem:[#allocation7 + $0x1c] sm:$0xf]
    %v91 = vld [vmem:[#allocation7 + $0x20] sm:$0xf]
    %v92 = vld [vmem:[#allocation7 + $0x24] sm:$0xf]
    %v93 = vld [vmem:[#allocation7 + $0x28] sm:$0xf]
    %v94 = vld [vmem:[#allocation7 + $0x2c] sm:$0xf]
    %v95 = vld [vmem:[#allocation7 + $0x30] sm:$0xf]
    %v96 = vld [vmem:[#allocation7 + $0x34] sm:$0xf]
    %v97 = vld [vmem:[#allocation7 + $0x38] sm:$0xf]
    %v98 = vld [vmem:[#allocation7 + $0x3c] sm:$0xf]
    %v99 = vld [vmem:[%s3] sm:$0x1]
    %v100 = vld [vmem:[#allocation8] sm:$0xf]
    %v101 = vld [vmem:[#allocation8 + $0x4] sm:$0xf]
    %v102 = vld [vmem:[#allocation8 + $0x8] sm:$0xf]
    %v103 = vld [vmem:[#allocation8 + $0xc] sm:$0xf]
    %v104 = vld [vmem:[#allocation8 + $0x10] sm:$0xf]
    %v105 = vld [vmem:[#allocation8 + $0x14] sm:$0xf]
    %v106 = vld [vmem:[#allocation8 + $0x18] sm:$0xf]
    %v107 = vld [vmem:[#allocation8 + $0x1c] sm:$0xf]
    %v108 = vld [vmem:[#allocation8 + $0x20] sm:$0xf]
    %v109 = vld [vmem:[#allocation8 + $0x24] sm:$0xf]
    %v110 = vld [vmem:[#allocation8 + $0x28] sm:$0xf]
    %v111 = vld [vmem:[#allocation8 + $0x2c] sm:$0xf]
    %v112 = vld [vmem:[#allocation8 + $0x30] sm:$0xf]
    %v113 = vld [vmem:[#allocation8 + $0x34] sm:$0xf]
    %v114 = vld [vmem:[#allocation8 + $0x38] sm:$0xf]
    %v115 = vld [vmem:[#allocation8 + $0x3c] sm:$0xf]
    %v116 = vld [vmem:[%s5] sm:$0x1]
    %v117 = vld [vmem:[#allocation2] sm:$0xf]
    %v118 = vld [vmem:[#allocation2 + $0x4] sm:$0xf]
    %v119 = vld [vmem:[#allocation2 + $0x8] sm:$0xf]
    %v120 = vld [vmem:[#allocation2 + $0xc] sm:$0xf]
    %v121 = vld [vmem:[#allocation2 + $0x10] sm:$0xf]
    %v122 = vld [vmem:[#allocation2 + $0x14] sm:$0xf]
    %v123 = vld [vmem:[#allocation2 + $0x18] sm:$0xf]
    %v124 = vld [vmem:[#allocation2 + $0x1c] sm:$0xf]
    %v125 = vld [vmem:[#allocation2 + $0x20] sm:$0xf]
    %v126 = vld [vmem:[#allocation2 + $0x24] sm:$0xf]
    %v127 = vld [vmem:[#allocation2 + $0x28] sm:$0xf]
    %v128 = vld [vmem:[#allocation2 + $0x2c] sm:$0xf]
    %v129 = vld [vmem:[#allocation2 + $0x30] sm:$0xf]
    %v130 = vld [vmem:[#allocation2 + $0x34] sm:$0xf]
    %v131 = vld [vmem:[#allocation2 + $0x38] sm:$0xf]
    %v132 = vld [vmem:[#allocation2 + $0x3c] sm:$0xf]
    %v133 = vld [vmem:[#allocation2 + $0x40] sm:$0xf]
    %v134 = vld [vmem:[#allocation2 + $0x44] sm:$0xf]
    %v135 = vld [vmem:[#allocation2 + $0x48] sm:$0xf]
    %v136 = vld [vmem:[#allocation2 + $0x4c] sm:$0xf]
    %v137 = vld [vmem:[#allocation2 + $0x50] sm:$0xf]
    %v138 = vld [vmem:[#allocation2 + $0x54] sm:$0xf]
    %v139 = vld [vmem:[#allocation2 + $0x58] sm:$0xf]
    %v140 = vld [vmem:[#allocation2 + $0x5c] sm:$0xf]
    %v141 = vld [vmem:[#allocation2 + $0x60] sm:$0xf]
    %v142 = vld [vmem:[#allocation2 + $0x64] sm:$0xf]
    %v143 = vld [vmem:[#allocation2 + $0x68] sm:$0xf]
    %v144 = vld [vmem:[#allocation2 + $0x6c] sm:$0xf]
    %v145 = vld [vmem:[#allocation2 + $0x70] sm:$0xf]
    %v146 = vld [vmem:[#allocation2 + $0x74] sm:$0xf]
    %v147 = vld [vmem:[#allocation2 + $0x78] sm:$0xf]
    %v148 = vld [vmem:[#allocation2 + $0x7c] sm:$0xf]
    %v150 = vlaneseq
    %v151 = vshrl.u32 %v150, 7
    %v152 = vsub.s32 0, %v151
    %v153 = vrot.slane %v99, %v152
    %v187 = vunpack.c.l.b16 %v117
    %v188 = vunpack.c.l.b16 %v118
    %v189 = vunpack.c.l.b16 %v119
    %v190 = vunpack.c.l.b16 %v120
    %v191 = vunpack.c.l.b16 %v121
    %v192 = vunpack.c.l.b16 %v122
    %v193 = vunpack.c.l.b16 %v123
    %v194 = vunpack.c.l.b16 %v124
    %v195 = vunpack.c.l.b16 %v125
    %v196 = vunpack.c.l.b16 %v126
    %v197 = vunpack.c.l.b16 %v127
    %v198 = vunpack.c.l.b16 %v128
    %v199 = vunpack.c.l.b16 %v129
    %v200 = vunpack.c.l.b16 %v130
    %v201 = vunpack.c.l.b16 %v131
    %v202 = vunpack.c.l.b16 %v132
    %v203 = vunpack.c.l.b16 %v133
    %v204 = vunpack.c.l.b16 %v134
    %v205 = vunpack.c.l.b16 %v135
    %v206 = vunpack.c.l.b16 %v136
    %v207 = vunpack.c.l.b16 %v137
    %v208 = vunpack.c.l.b16 %v138
    %v209 = vunpack.c.l.b16 %v139
    %v210 = vunpack.c.l.b16 %v140
    %v211 = vunpack.c.l.b16 %v141
    %v212 = vunpack.c.l.b16 %v142
    %v213 = vunpack.c.l.b16 %v143
    %v214 = vunpack.c.l.b16 %v144
    %v215 = vunpack.c.l.b16 %v145
    %v216 = vunpack.c.l.b16 %v146
    %v217 = vunpack.c.l.b16 %v147
    %v218 = vunpack.c.l.b16 %v148
    %v219 = vpack.c.b16 %v188, %v187
    %v220 = vpack.c.b16 %v190, %v189
    %v221 = vpack.c.b16 %v192, %v191
    %v222 = vpack.c.b16 %v194, %v193
    %v223 = vpack.c.b16 %v196, %v195
    %v224 = vpack.c.b16 %v198, %v197
    %v225 = vpack.c.b16 %v200, %v199
    %v226 = vpack.c.b16 %v202, %v201
    %v227 = vpack.c.b16 %v204, %v203
    %v228 = vpack.c.b16 %v206, %v205
    %v229 = vpack.c.b16 %v208, %v207
    %v230 = vpack.c.b16 %v210, %v209
    %v231 = vpack.c.b16 %v212, %v211
    %v232 = vpack.c.b16 %v214, %v213
    %v233 = vpack.c.b16 %v216, %v215
    %v234 = vpack.c.b16 %v218, %v217
    %v267 = vunpack.c.l.b16 %v83
    %v268 = vunpack.c.l.b16 %v84
    %v269 = vunpack.c.l.b16 %v85
    %v270 = vunpack.c.l.b16 %v86
    %v271 = vunpack.c.l.b16 %v87
    %v272 = vunpack.c.l.b16 %v88
    %v273 = vunpack.c.l.b16 %v89
    %v274 = vunpack.c.l.b16 %v90
    %v275 = vunpack.c.l.b16 %v91
    %v276 = vunpack.c.l.b16 %v92
    %v277 = vunpack.c.l.b16 %v93
    %v278 = vunpack.c.l.b16 %v94
    %v279 = vunpack.c.l.b16 %v95
    %v280 = vunpack.c.l.b16 %v96
    %v281 = vunpack.c.l.b16 %v97
    %v282 = vunpack.c.l.b16 %v98
    %v283 = vpack.c.b16 %v268, %v267
    %v284 = vpack.c.b16 %v270, %v269
    %v285 = vpack.c.b16 %v272, %v271
    %v286 = vpack.c.b16 %v274, %v273
    %v287 = vpack.c.b16 %v276, %v275
    %v288 = vpack.c.b16 %v278, %v277
    %v289 = vpack.c.b16 %v280, %v279
    %v290 = vpack.c.b16 %v282, %v281
    %299 = vmatprep.subr.bf16.mxu0 0
    %300 = vmatpush1.bf16.msra.mxu0 %v283
    %301 = vmatprep.subr.bf16.mxu0 0
    %302 = vmatpush1.bf16.msra.mxu0 %v284
    %303 = vmatprep.subr.bf16.mxu0 0
    %304 = vmatpush1.bf16.msra.mxu0 %v285
    %305 = vmatprep.subr.bf16.mxu0 0
    %306 = vmatpush1.bf16.msra.mxu0 %v286
    %307 = vmatprep.subr.bf16.mxu0 0
    %308 = vmatpush1.bf16.msra.mxu0 %v287
    %309 = vmatprep.subr.bf16.mxu0 0
    %310 = vmatpush1.bf16.msra.mxu0 %v288
    %311 = vmatprep.subr.bf16.mxu0 0
    %312 = vmatpush1.bf16.msra.mxu0 %v289
    %313 = vmatprep.subr.bf16.mxu0 0
    %314 = vmatpush1.bf16.msra.mxu0 %v290
    %315 = vmatprep.subr.bf16.mxu0 0
    %316 = vmatpush1.bf16.msra.mxu0 0
    %317 = vmatprep.subr.bf16.mxu0 0
    %318 = vmatpush1.bf16.msra.mxu0 0
    %319 = vmatprep.subr.bf16.mxu0 0
    %320 = vmatpush1.bf16.msra.mxu0 0
    %321 = vmatprep.subr.bf16.mxu0 0
    %322 = vmatpush1.bf16.msra.mxu0 0
    %323 = vmatprep.subr.bf16.mxu0 0
    %324 = vmatpush1.bf16.msra.mxu0 0
    %325 = vmatprep.subr.bf16.mxu0 0
    %326 = vmatpush1.bf16.msra.mxu0 0
    %327 = vmatprep.subr.bf16.mxu0 0
    %328 = vmatpush1.bf16.msra.mxu0 0
    %329 = vmatprep.subr.bf16.mxu0 0
    %330 = vmatpush1.bf16.msra.mxu0 0
    %331 = vmatprep.mubr.bf16.mxu0 0
    %332 = vmatmul.mubr.bf16.gmra.mrb[0].mxu0 %v219
    %v333 = vpop.f32.mrb[0].mxu0
    %v334 = vadd.f32 %v153, %v333
    %v335 = vpop.f32.mrb[0].mxu0
    %v336 = vpop.f32.mrb[0].mxu0
    %v337 = vadd.f32 %v153, %v336
    %v338 = vpop.f32.mrb[0].mxu0
    %339 = vmatprep.mubr.bf16.mxu0 0
    %340 = vmatmul.mubr.bf16.gmra.mrb[0].mxu0 %v220
    %v341 = vpop.f32.mrb[0].mxu0
    %v342 = vadd.f32 %v153, %v341
    %v343 = vpop.f32.mrb[0].mxu0
    %v344 = vpop.f32.mrb[0].mxu0
    %v345 = vadd.f32 %v153, %v344
    %v346 = vpop.f32.mrb[0].mxu0
    %347 = vmatprep.mubr.bf16.mxu0 0
    %348 = vmatmul.mubr.bf16.gmra.mrb[0].mxu0 %v221
    %v349 = vpop.f32.mrb[0].mxu0
    %v350 = vadd.f32 %v153, %v349
    %v351 = vpop.f32.mrb[0].mxu0
    %v352 = vpop.f32.mrb[0].mxu0
    %v353 = vadd.f32 %v153, %v352
    %v354 = vpop.f32.mrb[0].mxu0
    %355 = vmatprep.mubr.bf16.mxu0 0
    %356 = vmatmul.mubr.bf16.gmra.mrb[0].mxu0 %v222
    %v357 = vpop.f32.mrb[0].mxu0
    %v358 = vadd.f32 %v153, %v357
    %v359 = vpop.f32.mrb[0].mxu0
    %v360 = vpop.f32.mrb[0].mxu0
    %v361 = vadd.f32 %v153, %v360
    %v362 = vpop.f32.mrb[0].mxu0
    %363 = vmatprep.mubr.bf16.mxu0 0
    %364 = vmatmul.mubr.bf16.gmra.mrb[0].mxu0 %v223
    %v365 = vpop.f32.mrb[0].mxu0
    %v366 = vadd.f32 %v153, %v365
    %v367 = vpop.f32.mrb[0].mxu0
    %v368 = vpop.f32.mrb[0].mxu0
    %v369 = vadd.f32 %v153, %v368
    %v370 = vpop.f32.mrb[0].mxu0
    %371 = vmatprep.mubr.bf16.mxu0 0
    %372 = vmatmul.mubr.bf16.gmra.mrb[0].mxu0 %v224
    %v373 = vpop.f32.mrb[0].mxu0
    %v374 = vadd.f32 %v153, %v373
    %v375 = vpop.f32.mrb[0].mxu0
    %v376 = vpop.f32.mrb[0].mxu0
    %v377 = vadd.f32 %v153, %v376
    %v378 = vpop.f32.mrb[0].mxu0
    %379 = vmatprep.mubr.bf16.mxu0 0
    %380 = vmatmul.mubr.bf16.gmra.mrb[0].mxu0 %v225
    %v381 = vpop.f32.mrb[0].mxu0
    %v382 = vadd.f32 %v153, %v381
    %v383 = vpop.f32.mrb[0].mxu0
    %v384 = vpop.f32.mrb[0].mxu0
    %v385 = vadd.f32 %v153, %v384
    %v386 = vpop.f32.mrb[0].mxu0
    %387 = vmatprep.mubr.bf16.mxu0 0
    %388 = vmatmul.mubr.bf16.gmra.mrb[0].mxu0 %v226
    %v389 = vpop.f32.mrb[0].mxu0
    %v390 = vadd.f32 %v153, %v389
    %v391 = vpop.f32.mrb[0].mxu0
    %v392 = vpop.f32.mrb[0].mxu0
    %v393 = vadd.f32 %v153, %v392
    %v394 = vpop.f32.mrb[0].mxu0
    %395 = vmatprep.mubr.bf16.mxu0 0
    %396 = vmatmul.mubr.bf16.gmra.mrb[0].mxu0 %v227
    %v397 = vpop.f32.mrb[0].mxu0
    %v398 = vadd.f32 %v153, %v397
    %v399 = vpop.f32.mrb[0].mxu0
    %v400 = vpop.f32.mrb[0].mxu0
    %v401 = vadd.f32 %v153, %v400
    %v402 = vpop.f32.mrb[0].mxu0
    %403 = vmatprep.mubr.bf16.mxu0 0
    %404 = vmatmul.mubr.bf16.gmra.mrb[0].mxu0 %v228
    %v405 = vpop.f32.mrb[0].mxu0
    %v406 = vadd.f32 %v153, %v405
    %v407 = vpop.f32.mrb[0].mxu0
    %v408 = vpop.f32.mrb[0].mxu0
    %v409 = vadd.f32 %v153, %v408
    %v410 = vpop.f32.mrb[0].mxu0
    %411 = vmatprep.mubr.bf16.mxu0 0
    %412 = vmatmul.mubr.bf16.gmra.mrb[0].mxu0 %v229
    %v413 = vpop.f32.mrb[0].mxu0
    %v414 = vadd.f32 %v153, %v413
    %v415 = vpop.f32.mrb[0].mxu0
    %v416 = vpop.f32.mrb[0].mxu0
    %v417 = vadd.f32 %v153, %v416
    %v418 = vpop.f32.mrb[0].mxu0
    %419 = vmatprep.mubr.bf16.mxu0 0
    %420 = vmatmul.mubr.bf16.gmra.mrb[0].mxu0 %v230
    %v421 = vpop.f32.mrb[0].mxu0
    %v422 = vadd.f32 %v153, %v421
    %v423 = vpop.f32.mrb[0].mxu0
    %v424 = vpop.f32.mrb[0].mxu0
    %v425 = vadd.f32 %v153, %v424
    %v426 = vpop.f32.mrb[0].mxu0
    %427 = vmatprep.mubr.bf16.mxu0 0
    %428 = vmatmul.mubr.bf16.gmra.mrb[0].mxu0 %v231
    %v429 = vpop.f32.mrb[0].mxu0
    %v430 = vadd.f32 %v153, %v429
    %v431 = vpop.f32.mrb[0].mxu0
    %v432 = vpop.f32.mrb[0].mxu0
    %v433 = vadd.f32 %v153, %v432
    %v434 = vpop.f32.mrb[0].mxu0
    %435 = vmatprep.mubr.bf16.mxu0 0
    %436 = vmatmul.mubr.bf16.gmra.mrb[0].mxu0 %v232
    %v437 = vpop.f32.mrb[0].mxu0
    %v438 = vadd.f32 %v153, %v437
    %v439 = vpop.f32.mrb[0].mxu0
    %v440 = vpop.f32.mrb[0].mxu0
    %v441 = vadd.f32 %v153, %v440
    %v442 = vpop.f32.mrb[0].mxu0
    %443 = vmatprep.mubr.bf16.mxu0 0
    %444 = vmatmul.mubr.bf16.gmra.mrb[0].mxu0 %v233
    %v445 = vpop.f32.mrb[0].mxu0
    %v446 = vadd.f32 %v153, %v445
    %v447 = vpop.f32.mrb[0].mxu0
    %v448 = vpop.f32.mrb[0].mxu0
    %v449 = vadd.f32 %v153, %v448
    %v450 = vpop.f32.mrb[0].mxu0
    %451 = vmatprep.mubr.bf16.mxu0 0
    %452 = vmatmul.mubr.bf16.gmra.mrb[0].mxu0 %v234
    %v453 = vpop.f32.mrb[0].mxu0
    %v454 = vadd.f32 %v153, %v453
    %v455 = vpop.f32.mrb[0].mxu0
    %v456 = vpop.f32.mrb[0].mxu0
    %v457 = vadd.f32 %v153, %v456
    %v458 = vpop.f32.mrb[0].mxu0
    %459 = vdwg.mxu0
    %vm460 = vcmp.gt.f32.partialorder %v334, 0.0
    %vm461 = vcmp.gt.f32.partialorder %v337, 0.0
    %vm462 = vcmp.gt.f32.partialorder %v342, 0.0
    %vm463 = vcmp.gt.f32.partialorder %v345, 0.0
    %vm464 = vcmp.gt.f32.partialorder %v350, 0.0
    %vm465 = vcmp.gt.f32.partialorder %v353, 0.0
    %vm466 = vcmp.gt.f32.partialorder %v358, 0.0
    %vm467 = vcmp.gt.f32.partialorder %v361, 0.0
    %vm468 = vcmp.gt.f32.partialorder %v366, 0.0
    %vm469 = vcmp.gt.f32.partialorder %v369, 0.0
    %vm470 = vcmp.gt.f32.partialorder %v374, 0.0
    %vm471 = vcmp.gt.f32.partialorder %v377, 0.0
    %vm472 = vcmp.gt.f32.partialorder %v382, 0.0
    %vm473 = vcmp.gt.f32.partialorder %v385, 0.0
    %vm474 = vcmp.gt.f32.partialorder %v390, 0.0
    %vm475 = vcmp.gt.f32.partialorder %v393, 0.0
    %vm476 = vcmp.gt.f32.partialorder %v398, 0.0
    %vm477 = vcmp.gt.f32.partialorder %v401, 0.0
    %vm478 = vcmp.gt.f32.partialorder %v406, 0.0
    %vm479 = vcmp.gt.f32.partialorder %v409, 0.0
    %vm480 = vcmp.gt.f32.partialorder %v414, 0.0
    %vm481 = vcmp.gt.f32.partialorder %v417, 0.0
    %vm482 = vcmp.gt.f32.partialorder %v422, 0.0
    %vm483 = vcmp.gt.f32.partialorder %v425, 0.0
    %vm484 = vcmp.gt.f32.partialorder %v430, 0.0
    %vm485 = vcmp.gt.f32.partialorder %v433, 0.0
    %vm486 = vcmp.gt.f32.partialorder %v438, 0.0
    %vm487 = vcmp.gt.f32.partialorder %v441, 0.0
    %vm488 = vcmp.gt.f32.partialorder %v446, 0.0
    %vm489 = vcmp.gt.f32.partialorder %v449, 0.0
    %vm490 = vcmp.gt.f32.partialorder %v454, 0.0
    %vm491 = vcmp.gt.f32.partialorder %v457, 0.0
    %v492 = vmin.f32 %v334, 0.0
    %v493 = vmin.f32 %v337, 0.0
    %v494 = vmin.f32 %v342, 0.0
    %v495 = vmin.f32 %v345, 0.0
    %v496 = vmin.f32 %v350, 0.0
    %v497 = vmin.f32 %v353, 0.0
    %v498 = vmin.f32 %v358, 0.0
    %v499 = vmin.f32 %v361, 0.0
    %v500 = vmin.f32 %v366, 0.0
    %v501 = vmin.f32 %v369, 0.0
    %v502 = vmin.f32 %v374, 0.0
    %v503 = vmin.f32 %v377, 0.0
    %v504 = vmin.f32 %v382, 0.0
    %v505 = vmin.f32 %v385, 0.0
    %v506 = vmin.f32 %v390, 0.0
    %v507 = vmin.f32 %v393, 0.0
    %v508 = vmin.f32 %v398, 0.0
    %v509 = vmin.f32 %v401, 0.0
    %v510 = vmin.f32 %v406, 0.0
    %v511 = vmin.f32 %v409, 0.0
    %v512 = vmin.f32 %v414, 0.0
    %v513 = vmin.f32 %v417, 0.0
    %v514 = vmin.f32 %v422, 0.0
    %v515 = vmin.f32 %v425, 0.0
    %v516 = vmin.f32 %v430, 0.0
    %v517 = vmin.f32 %v433, 0.0
    %v518 = vmin.f32 %v438, 0.0
    %v519 = vmin.f32 %v441, 0.0
    %v520 = vmin.f32 %v446, 0.0
    %v521 = vmin.f32 %v449, 0.0
    %v522 = vmin.f32 %v454, 0.0
    %v523 = vmin.f32 %v457, 0.0
    %v524 = vmul.f32 %v492, 1.442695
    %v525 = vpow.pop %v524
    %v526 = vmul.f32 %v493, 1.442695
    %v527 = vpow.pop %v526
    %v528 = vmul.f32 %v494, 1.442695
    %v529 = vpow.pop %v528
    %v530 = vmul.f32 %v495, 1.442695
    %v531 = vpow.pop %v530
    %v532 = vmul.f32 %v496, 1.442695
    %v533 = vpow.pop %v532
    %v534 = vmul.f32 %v497, 1.442695
    %v535 = vpow.pop %v534
    %v536 = vmul.f32 %v498, 1.442695
    %v537 = vpow.pop %v536
    %v538 = vmul.f32 %v499, 1.442695
    %v539 = vpow.pop %v538
    %v540 = vmul.f32 %v500, 1.442695
    %v541 = vpow.pop %v540
    %v542 = vmul.f32 %v501, 1.442695
    %v543 = vpow.pop %v542
    %v544 = vmul.f32 %v502, 1.442695
    %v545 = vpow.pop %v544
    %v546 = vmul.f32 %v503, 1.442695
    %v547 = vpow.pop %v546
    %v548 = vmul.f32 %v504, 1.442695
    %v549 = vpow.pop %v548
    %v550 = vmul.f32 %v505, 1.442695
    %v551 = vpow.pop %v550
    %v552 = vmul.f32 %v506, 1.442695
    %v553 = vpow.pop %v552
    %v554 = vmul.f32 %v507, 1.442695
    %v555 = vpow.pop %v554
    %v556 = vmul.f32 %v508, 1.442695
    %v557 = vpow.pop %v556
    %v558 = vmul.f32 %v509, 1.442695
    %v559 = vpow.pop %v558
    %v560 = vmul.f32 %v510, 1.442695
    %v561 = vpow.pop %v560
    %v562 = vmul.f32 %v511, 1.442695
    %v563 = vpow.pop %v562
    %v564 = vmul.f32 %v512, 1.442695
    %v565 = vpow.pop %v564
    %v566 = vmul.f32 %v513, 1.442695
    %v567 = vpow.pop %v566
    %v568 = vmul.f32 %v514, 1.442695
    %v569 = vpow.pop %v568
    %v570 = vmul.f32 %v515, 1.442695
    %v571 = vpow.pop %v570
    %v572 = vmul.f32 %v516, 1.442695
    %v573 = vpow.pop %v572
    %v574 = vmul.f32 %v517, 1.442695
    %v575 = vpow.pop %v574
    %v576 = vmul.f32 %v518, 1.442695
    %v577 = vpow.pop %v576
    %v578 = vmul.f32 %v519, 1.442695
    %v579 = vpow.pop %v578
    %v580 = vmul.f32 %v520, 1.442695
    %v581 = vpow.pop %v580
    %v582 = vmul.f32 %v521, 1.442695
    %v583 = vpow.pop %v582
    %v584 = vmul.f32 %v522, 1.442695
    %v585 = vpow.pop %v584
    %v586 = vmul.f32 %v523, 1.442695
    %v587 = vpow.pop %v586
    %v588 = vsub.f32 %v525, 1.0
    %v589 = vsub.f32 %v527, 1.0
    %v590 = vsub.f32 %v529, 1.0
    %v591 = vsub.f32 %v531, 1.0
    %v592 = vsub.f32 %v533, 1.0
    %v593 = vsub.f32 %v535, 1.0
    %v594 = vsub.f32 %v537, 1.0
    %v595 = vsub.f32 %v539, 1.0
    %v596 = vsub.f32 %v541, 1.0
    %v597 = vsub.f32 %v543, 1.0
    %v598 = vsub.f32 %v545, 1.0
    %v599 = vsub.f32 %v547, 1.0
    %v600 = vsub.f32 %v549, 1.0
    %v601 = vsub.f32 %v551, 1.0
    %v602 = vsub.f32 %v553, 1.0
    %v603 = vsub.f32 %v555, 1.0
    %v604 = vsub.f32 %v557, 1.0
    %v605 = vsub.f32 %v559, 1.0
    %v606 = vsub.f32 %v561, 1.0
    %v607 = vsub.f32 %v563, 1.0
    %v608 = vsub.f32 %v565, 1.0
    %v609 = vsub.f32 %v567, 1.0
    %v610 = vsub.f32 %v569, 1.0
    %v611 = vsub.f32 %v571, 1.0
    %v612 = vsub.f32 %v573, 1.0
    %v613 = vsub.f32 %v575, 1.0
    %v614 = vsub.f32 %v577, 1.0
    %v615 = vsub.f32 %v579, 1.0
    %v616 = vsub.f32 %v581, 1.0
    %v617 = vsub.f32 %v583, 1.0
    %v618 = vsub.f32 %v585, 1.0
    %v619 = vsub.f32 %v587, 1.0
    %v620 = vsel %vm460, %v334, %v588
    %v621 = vsel %vm461, %v337, %v589
    %v622 = vsel %vm462, %v342, %v590
    %v623 = vsel %vm463, %v345, %v591
    %v624 = vsel %vm464, %v350, %v592
    %v625 = vsel %vm465, %v353, %v593
    %v626 = vsel %vm466, %v358, %v594
    %v627 = vsel %vm467, %v361, %v595
    %v628 = vsel %vm468, %v366, %v596
    %v629 = vsel %vm469, %v369, %v597
    %v630 = vsel %vm470, %v374, %v598
    %v631 = vsel %vm471, %v377, %v599
    %v632 = vsel %vm472, %v382, %v600
    %v633 = vsel %vm473, %v385, %v601
    %v634 = vsel %vm474, %v390, %v602
    %v635 = vsel %vm475, %v393, %v603
    %v636 = vsel %vm476, %v398, %v604
    %v637 = vsel %vm477, %v401, %v605
    %v638 = vsel %vm478, %v406, %v606
    %v639 = vsel %vm479, %v409, %v607
    %v640 = vsel %vm480, %v414, %v608
    %v641 = vsel %vm481, %v417, %v609
    %v642 = vsel %vm482, %v422, %v610
    %v643 = vsel %vm483, %v425, %v611
    %v644 = vsel %vm484, %v430, %v612
    %v645 = vsel %vm485, %v433, %v613
    %v646 = vsel %vm486, %v438, %v614
    %v647 = vsel %vm487, %v441, %v615
    %v648 = vsel %vm488, %v446, %v616
    %v649 = vsel %vm489, %v449, %v617
    %v650 = vsel %vm490, %v454, %v618
    %v651 = vsel %vm491, %v457, %v619
    %v652 = vpack.c.bf16 %v621, %v620
    %v653 = vpack.c.bf16 %v623, %v622
    %v654 = vpack.c.bf16 %v625, %v624
    %v655 = vpack.c.bf16 %v627, %v626
    %v656 = vpack.c.bf16 %v629, %v628
    %v657 = vpack.c.bf16 %v631, %v630
    %v658 = vpack.c.bf16 %v633, %v632
    %v659 = vpack.c.bf16 %v635, %v634
    %v660 = vpack.c.bf16 %v637, %v636
    %v661 = vpack.c.bf16 %v639, %v638
    %v662 = vpack.c.bf16 %v641, %v640
    %v663 = vpack.c.bf16 %v643, %v642
    %v664 = vpack.c.bf16 %v645, %v644
    %v665 = vpack.c.bf16 %v647, %v646
    %v666 = vpack.c.bf16 %v649, %v648
    %v667 = vpack.c.bf16 %v651, %v650
    %v669 = vlaneseq
    %v670 = vshrl.u32 %v669, 7
    %v671 = vsub.s32 0, %v670
    %v672 = vrot.slane %v116, %v671
    %v690 = vunpack.c.l.b16 %v100
    %v691 = vunpack.c.l.b16 %v101
    %v692 = vunpack.c.l.b16 %v102
    %v693 = vunpack.c.l.b16 %v103
    %v694 = vunpack.c.l.b16 %v104
    %v695 = vunpack.c.l.b16 %v105
    %v696 = vunpack.c.l.b16 %v106
    %v697 = vunpack.c.l.b16 %v107
    %v698 = vunpack.c.l.b16 %v108
    %v699 = vunpack.c.l.b16 %v109
    %v700 = vunpack.c.l.b16 %v110
    %v701 = vunpack.c.l.b16 %v111
    %v702 = vunpack.c.l.b16 %v112
    %v703 = vunpack.c.l.b16 %v113
    %v704 = vunpack.c.l.b16 %v114
    %v705 = vunpack.c.l.b16 %v115
    %v706 = vpack.c.b16 %v691, %v690
    %v707 = vpack.c.b16 %v693, %v692
    %v708 = vpack.c.b16 %v695, %v694
    %v709 = vpack.c.b16 %v697, %v696
    %v710 = vpack.c.b16 %v699, %v698
    %v711 = vpack.c.b16 %v701, %v700
    %v712 = vpack.c.b16 %v703, %v702
    %v713 = vpack.c.b16 %v705, %v704
    %722 = vmatprep.subr.bf16.mxu0 0
    %723 = vmatpush1.bf16.msra.mxu0 %v706
    %724 = vmatprep.subr.bf16.mxu0 0
    %725 = vmatpush1.bf16.msra.mxu0 %v707
    %726 = vmatprep.subr.bf16.mxu0 0
    %727 = vmatpush1.bf16.msra.mxu0 %v708
    %728 = vmatprep.subr.bf16.mxu0 0
    %729 = vmatpush1.bf16.msra.mxu0 %v709
    %730 = vmatprep.subr.bf16.mxu0 0
    %731 = vmatpush1.bf16.msra.mxu0 %v710
    %732 = vmatprep.subr.bf16.mxu0 0
    %733 = vmatpush1.bf16.msra.mxu0 %v711
    %734 = vmatprep.subr.bf16.mxu0 0
    %735 = vmatpush1.bf16.msra.mxu0 %v712
    %736 = vmatprep.subr.bf16.mxu0 0
    %737 = vmatpush1.bf16.msra.mxu0 %v713
    %738 = vmatprep.subr.bf16.mxu0 0
    %739 = vmatpush1.bf16.msra.mxu0 0
    %740 = vmatprep.subr.bf16.mxu0 0
    %741 = vmatpush1.bf16.msra.mxu0 0
    %742 = vmatprep.subr.bf16.mxu0 0
    %743 = vmatpush1.bf16.msra.mxu0 0
    %744 = vmatprep.subr.bf16.mxu0 0
    %745 = vmatpush1.bf16.msra.mxu0 0
    %746 = vmatprep.subr.bf16.mxu0 0
    %747 = vmatpush1.bf16.msra.mxu0 0
    %748 = vmatprep.subr.bf16.mxu0 0
    %749 = vmatpush1.bf16.msra.mxu0 0
    %750 = vmatprep.subr.bf16.mxu0 0
    %751 = vmatpush1.bf16.msra.mxu0 0
    %752 = vmatprep.subr.bf16.mxu0 0
    %753 = vmatpush1.bf16.msra.mxu0 0
    %754 = vmatprep.mubr.bf16.mxu0 0
    %755 = vmatmul.mubr.bf16.gmra.mrb[0].mxu0 %v652
    %v756 = vpop.f32.mrb[0].mxu0
    %v757 = vadd.f32 %v672, %v756
    %v758 = vpop.f32.mrb[0].mxu0
    %v759 = vpop.f32.mrb[0].mxu0
    %v760 = vadd.f32 %v672, %v759
    %v761 = vpop.f32.mrb[0].mxu0
    %762 = vmatprep.mubr.bf16.mxu0 0
    %763 = vmatmul.mubr.bf16.gmra.mrb[0].mxu0 %v653
    %v764 = vpop.f32.mrb[0].mxu0
    %v765 = vadd.f32 %v672, %v764
    %v766 = vpop.f32.mrb[0].mxu0
    %v767 = vpop.f32.mrb[0].mxu0
    %v768 = vadd.f32 %v672, %v767
    %v769 = vpop.f32.mrb[0].mxu0
    %770 = vmatprep.mubr.bf16.mxu0 0
    %771 = vmatmul.mubr.bf16.gmra.mrb[0].mxu0 %v654
    %v772 = vpop.f32.mrb[0].mxu0
    %v773 = vadd.f32 %v672, %v772
    %v774 = vpop.f32.mrb[0].mxu0
    %v775 = vpop.f32.mrb[0].mxu0
    %v776 = vadd.f32 %v672, %v775
    %v777 = vpop.f32.mrb[0].mxu0
    %778 = vmatprep.mubr.bf16.mxu0 0
    %779 = vmatmul.mubr.bf16.gmra.mrb[0].mxu0 %v655
    %v780 = vpop.f32.mrb[0].mxu0
    %v781 = vadd.f32 %v672, %v780
    %v782 = vpop.f32.mrb[0].mxu0
    %v783 = vpop.f32.mrb[0].mxu0
    %v784 = vadd.f32 %v672, %v783
    %v785 = vpop.f32.mrb[0].mxu0
    %786 = vmatprep.mubr.bf16.mxu0 0
    %787 = vmatmul.mubr.bf16.gmra.mrb[0].mxu0 %v656
    %v788 = vpop.f32.mrb[0].mxu0
    %v789 = vadd.f32 %v672, %v788
    %v790 = vpop.f32.mrb[0].mxu0
    %v791 = vpop.f32.mrb[0].mxu0
    %v792 = vadd.f32 %v672, %v791
    %v793 = vpop.f32.mrb[0].mxu0
    %794 = vmatprep.mubr.bf16.mxu0 0
    %795 = vmatmul.mubr.bf16.gmra.mrb[0].mxu0 %v657
    %v796 = vpop.f32.mrb[0].mxu0
    %v797 = vadd.f32 %v672, %v796
    %v798 = vpop.f32.mrb[0].mxu0
    %v799 = vpop.f32.mrb[0].mxu0
    %v800 = vadd.f32 %v672, %v799
    %v801 = vpop.f32.mrb[0].mxu0
    %802 = vmatprep.mubr.bf16.mxu0 0
    %803 = vmatmul.mubr.bf16.gmra.mrb[0].mxu0 %v658
    %v804 = vpop.f32.mrb[0].mxu0
    %v805 = vadd.f32 %v672, %v804
    %v806 = vpop.f32.mrb[0].mxu0
    %v807 = vpop.f32.mrb[0].mxu0
    %v808 = vadd.f32 %v672, %v807
    %v809 = vpop.f32.mrb[0].mxu0
    %810 = vmatprep.mubr.bf16.mxu0 0
    %811 = vmatmul.mubr.bf16.gmra.mrb[0].mxu0 %v659
    %v812 = vpop.f32.mrb[0].mxu0
    %v813 = vadd.f32 %v672, %v812
    %v814 = vpop.f32.mrb[0].mxu0
    %v815 = vpop.f32.mrb[0].mxu0
    %v816 = vadd.f32 %v672, %v815
    %v817 = vpop.f32.mrb[0].mxu0
    %818 = vmatprep.mubr.bf16.mxu0 0
    %819 = vmatmul.mubr.bf16.gmra.mrb[0].mxu0 %v660
    %v820 = vpop.f32.mrb[0].mxu0
    %v821 = vadd.f32 %v672, %v820
    %v822 = vpop.f32.mrb[0].mxu0
    %v823 = vpop.f32.mrb[0].mxu0
    %v824 = vadd.f32 %v672, %v823
    %v825 = vpop.f32.mrb[0].mxu0
    %826 = vmatprep.mubr.bf16.mxu0 0
    %827 = vmatmul.mubr.bf16.gmra.mrb[0].mxu0 %v661
    %v828 = vpop.f32.mrb[0].mxu0
    %v829 = vadd.f32 %v672, %v828
    %v830 = vpop.f32.mrb[0].mxu0
    %v831 = vpop.f32.mrb[0].mxu0
    %v832 = vadd.f32 %v672, %v831
    %v833 = vpop.f32.mrb[0].mxu0
    %834 = vmatprep.mubr.bf16.mxu0 0
    %835 = vmatmul.mubr.bf16.gmra.mrb[0].mxu0 %v662
    %v836 = vpop.f32.mrb[0].mxu0
    %v837 = vadd.f32 %v672, %v836
    %v838 = vpop.f32.mrb[0].mxu0
    %v839 = vpop.f32.mrb[0].mxu0
    %v840 = vadd.f32 %v672, %v839
    %v841 = vpop.f32.mrb[0].mxu0
    %842 = vmatprep.mubr.bf16.mxu0 0
    %843 = vmatmul.mubr.bf16.gmra.mrb[0].mxu0 %v663
    %v844 = vpop.f32.mrb[0].mxu0
    %v845 = vadd.f32 %v672, %v844
    %v846 = vpop.f32.mrb[0].mxu0
    %v847 = vpop.f32.mrb[0].mxu0
    %v848 = vadd.f32 %v672, %v847
    %v849 = vpop.f32.mrb[0].mxu0
    %850 = vmatprep.mubr.bf16.mxu0 0
    %851 = vmatmul.mubr.bf16.gmra.mrb[0].mxu0 %v664
    %v852 = vpop.f32.mrb[0].mxu0
    %v853 = vadd.f32 %v672, %v852
    %v854 = vpop.f32.mrb[0].mxu0
    %v855 = vpop.f32.mrb[0].mxu0
    %v856 = vadd.f32 %v672, %v855
    %v857 = vpop.f32.mrb[0].mxu0
    %858 = vmatprep.mubr.bf16.mxu0 0
    %859 = vmatmul.mubr.bf16.gmra.mrb[0].mxu0 %v665
    %v860 = vpop.f32.mrb[0].mxu0
    %v861 = vadd.f32 %v672, %v860
    %v862 = vpop.f32.mrb[0].mxu0
    %v863 = vpop.f32.mrb[0].mxu0
    %v864 = vadd.f32 %v672, %v863
    %v865 = vpop.f32.mrb[0].mxu0
    %866 = vmatprep.mubr.bf16.mxu0 0
    %867 = vmatmul.mubr.bf16.gmra.mrb[0].mxu0 %v666
    %v868 = vpop.f32.mrb[0].mxu0
    %v869 = vadd.f32 %v672, %v868
    %v870 = vpop.f32.mrb[0].mxu0
    %v871 = vpop.f32.mrb[0].mxu0
    %v872 = vadd.f32 %v672, %v871
    %v873 = vpop.f32.mrb[0].mxu0
    %874 = vmatprep.mubr.bf16.mxu0 0
    %875 = vmatmul.mubr.bf16.gmra.mrb[0].mxu0 %v667
    %v876 = vpop.f32.mrb[0].mxu0
    %v877 = vadd.f32 %v672, %v876
    %v878 = vpop.f32.mrb[0].mxu0
    %v879 = vpop.f32.mrb[0].mxu0
    %v880 = vadd.f32 %v672, %v879
    %v881 = vpop.f32.mrb[0].mxu0
    %882 = vdwg.mxu0
    %v883 = vmul.f32 %v757, %v757
    %v884 = vmul.f32 %v760, %v760
    %v885 = vmul.f32 %v765, %v765
    %v886 = vmul.f32 %v768, %v768
    %v887 = vmul.f32 %v773, %v773
    %v888 = vmul.f32 %v776, %v776
    %v889 = vmul.f32 %v781, %v781
    %v890 = vmul.f32 %v784, %v784
    %v891 = vmul.f32 %v789, %v789
    %v892 = vmul.f32 %v792, %v792
    %v893 = vmul.f32 %v797, %v797
    %v894 = vmul.f32 %v800, %v800
    %v895 = vmul.f32 %v805, %v805
    %v896 = vmul.f32 %v808, %v808
    %v897 = vmul.f32 %v813, %v813
    %v898 = vmul.f32 %v816, %v816
    %v899 = vmul.f32 %v821, %v821
    %v900 = vmul.f32 %v824, %v824
    %v901 = vmul.f32 %v829, %v829
    %v902 = vmul.f32 %v832, %v832
    %v903 = vmul.f32 %v837, %v837
    %v904 = vmul.f32 %v840, %v840
    %v905 = vmul.f32 %v845, %v845
    %v906 = vmul.f32 %v848, %v848
    %v907 = vmul.f32 %v853, %v853
    %v908 = vmul.f32 %v856, %v856
    %v909 = vmul.f32 %v861, %v861
    %v910 = vmul.f32 %v864, %v864
    %v911 = vmul.f32 %v869, %v869
    %v912 = vmul.f32 %v872, %v872
    %v913 = vmul.f32 %v877, %v877
    %v914 = vmul.f32 %v880, %v880
    %915 = vadd.xlane.f32.xlu0 %v883
    %v916 = vpop.xlane.xlu0 %915
    %917 = vadd.xlane.f32.xlu0 %v884
    %v918 = vpop.xlane.xlu0 %917
    %919 = vadd.xlane.f32.xlu0 %v885
    %v920 = vpop.xlane.xlu0 %919
    %921 = vadd.xlane.f32.xlu0 %v886
    %v922 = vpop.xlane.xlu0 %921
    %923 = vadd.xlane.f32.xlu0 %v887
    %v924 = vpop.xlane.xlu0 %923
    %925 = vadd.xlane.f32.xlu0 %v888
    %v926 = vpop.xlane.xlu0 %925
    %927 = vadd.xlane.f32.xlu0 %v889
    %v928 = vpop.xlane.xlu0 %927
    %929 = vadd.xlane.f32.xlu0 %v890
    %v930 = vpop.xlane.xlu0 %929
    %931 = vadd.xlane.f32.xlu0 %v891
    %v932 = vpop.xlane.xlu0 %931
    %933 = vadd.xlane.f32.xlu0 %v892
    %v934 = vpop.xlane.xlu0 %933
    %935 = vadd.xlane.f32.xlu0 %v893
    %v936 = vpop.xlane.xlu0 %935
    %937 = vadd.xlane.f32.xlu0 %v894
    %v938 = vpop.xlane.xlu0 %937
    %939 = vadd.xlane.f32.xlu0 %v895
    %v940 = vpop.xlane.xlu0 %939
    %941 = vadd.xlane.f32.xlu0 %v896
    %v942 = vpop.xlane.xlu0 %941
    %943 = vadd.xlane.f32.xlu0 %v897
    %v944 = vpop.xlane.xlu0 %943
    %945 = vadd.xlane.f32.xlu0 %v898
    %v946 = vpop.xlane.xlu0 %945
    %947 = vadd.xlane.f32.xlu0 %v899
    %v948 = vpop.xlane.xlu0 %947
    %949 = vadd.xlane.f32.xlu0 %v900
    %v950 = vpop.xlane.xlu0 %949
    %951 = vadd.xlane.f32.xlu0 %v901
    %v952 = vpop.xlane.xlu0 %951
    %953 = vadd.xlane.f32.xlu0 %v902
    %v954 = vpop.xlane.xlu0 %953
    %955 = vadd.xlane.f32.xlu0 %v903
    %v956 = vpop.xlane.xlu0 %955
    %957 = vadd.xlane.f32.xlu0 %v904
    %v958 = vpop.xlane.xlu0 %957
    %959 = vadd.xlane.f32.xlu0 %v905
    %v960 = vpop.xlane.xlu0 %959
    %961 = vadd.xlane.f32.xlu0 %v906
    %v962 = vpop.xlane.xlu0 %961
    %963 = vadd.xlane.f32.xlu0 %v907
    %v964 = vpop.xlane.xlu0 %963
    %965 = vadd.xlane.f32.xlu0 %v908
    %v966 = vpop.xlane.xlu0 %965
    %967 = vadd.xlane.f32.xlu0 %v909
    %v968 = vpop.xlane.xlu0 %967
    %969 = vadd.xlane.f32.xlu0 %v910
    %v970 = vpop.xlane.xlu0 %969
    %971 = vadd.xlane.f32.xlu0 %v911
    %v972 = vpop.xlane.xlu0 %971
    %973 = vadd.xlane.f32.xlu0 %v912
    %v974 = vpop.xlane.xlu0 %973
    %975 = vadd.xlane.f32.xlu0 %v913
    %v976 = vpop.xlane.xlu0 %975
    %977 = vadd.xlane.f32.xlu0 %v914
    %v978 = vpop.xlane.xlu0 %977
    %v979 = vadd.f32 %v916, 1e-12
    %v980 = vadd.f32 %v918, 1e-12
    %v981 = vadd.f32 %v920, 1e-12
    %v982 = vadd.f32 %v922, 1e-12
    %v983 = vadd.f32 %v924, 1e-12
    %v984 = vadd.f32 %v926, 1e-12
    %v985 = vadd.f32 %v928, 1e-12
    %v986 = vadd.f32 %v930, 1e-12
    %v987 = vadd.f32 %v932, 1e-12
    %v988 = vadd.f32 %v934, 1e-12
    %v989 = vadd.f32 %v936, 1e-12
    %v990 = vadd.f32 %v938, 1e-12
    %v991 = vadd.f32 %v940, 1e-12
    %v992 = vadd.f32 %v942, 1e-12
    %v993 = vadd.f32 %v944, 1e-12
    %v994 = vadd.f32 %v946, 1e-12
    %v995 = vadd.f32 %v948, 1e-12
    %v996 = vadd.f32 %v950, 1e-12
    %v997 = vadd.f32 %v952, 1e-12
    %v998 = vadd.f32 %v954, 1e-12
    %v999 = vadd.f32 %v956, 1e-12
    %v1000 = vadd.f32 %v958, 1e-12
    %v1001 = vadd.f32 %v960, 1e-12
    %v1002 = vadd.f32 %v962, 1e-12
    %v1003 = vadd.f32 %v964, 1e-12
    %v1004 = vadd.f32 %v966, 1e-12
    %v1005 = vadd.f32 %v968, 1e-12
    %v1006 = vadd.f32 %v970, 1e-12
    %v1007 = vadd.f32 %v972, 1e-12
    %v1008 = vadd.f32 %v974, 1e-12
    %v1009 = vadd.f32 %v976, 1e-12
    %v1010 = vadd.f32 %v978, 1e-12
    %v1011 = vrsqrt.pop %v979
    %v1012 = vrsqrt.pop %v980
    %v1013 = vrsqrt.pop %v981
    %v1014 = vrsqrt.pop %v982
    %v1015 = vrsqrt.pop %v983
    %v1016 = vrsqrt.pop %v984
    %v1017 = vrsqrt.pop %v985
    %v1018 = vrsqrt.pop %v986
    %v1019 = vrsqrt.pop %v987
    %v1020 = vrsqrt.pop %v988
    %v1021 = vrsqrt.pop %v989
    %v1022 = vrsqrt.pop %v990
    %v1023 = vrsqrt.pop %v991
    %v1024 = vrsqrt.pop %v992
    %v1025 = vrsqrt.pop %v993
    %v1026 = vrsqrt.pop %v994
    %v1027 = vrsqrt.pop %v995
    %v1028 = vrsqrt.pop %v996
    %v1029 = vrsqrt.pop %v997
    %v1030 = vrsqrt.pop %v998
    %v1031 = vrsqrt.pop %v999
    %v1032 = vrsqrt.pop %v1000
    %v1033 = vrsqrt.pop %v1001
    %v1034 = vrsqrt.pop %v1002
    %v1035 = vrsqrt.pop %v1003
    %v1036 = vrsqrt.pop %v1004
    %v1037 = vrsqrt.pop %v1005
    %v1038 = vrsqrt.pop %v1006
    %v1039 = vrsqrt.pop %v1007
    %v1040 = vrsqrt.pop %v1008
    %v1041 = vrsqrt.pop %v1009
    %v1042 = vrsqrt.pop %v1010
    %v1043 = vmul.f32 %v1011, 1.118034
    %v1044 = vmul.f32 %v1012, 1.118034
    %v1045 = vmul.f32 %v1013, 1.118034
    %v1046 = vmul.f32 %v1014, 1.118034
    %v1047 = vmul.f32 %v1015, 1.118034
    %v1048 = vmul.f32 %v1016, 1.118034
    %v1049 = vmul.f32 %v1017, 1.118034
    %v1050 = vmul.f32 %v1018, 1.118034
    %v1051 = vmul.f32 %v1019, 1.118034
    %v1052 = vmul.f32 %v1020, 1.118034
    %v1053 = vmul.f32 %v1021, 1.118034
    %v1054 = vmul.f32 %v1022, 1.118034
    %v1055 = vmul.f32 %v1023, 1.118034
    %v1056 = vmul.f32 %v1024, 1.118034
    %v1057 = vmul.f32 %v1025, 1.118034
    %v1058 = vmul.f32 %v1026, 1.118034
    %v1059 = vmul.f32 %v1027, 1.118034
    %v1060 = vmul.f32 %v1028, 1.118034
    %v1061 = vmul.f32 %v1029, 1.118034
    %v1062 = vmul.f32 %v1030, 1.118034
    %v1063 = vmul.f32 %v1031, 1.118034
    %v1064 = vmul.f32 %v1032, 1.118034
    %v1065 = vmul.f32 %v1033, 1.118034
    %v1066 = vmul.f32 %v1034, 1.118034
    %v1067 = vmul.f32 %v1035, 1.118034
    %v1068 = vmul.f32 %v1036, 1.118034
    %v1069 = vmul.f32 %v1037, 1.118034
    %v1070 = vmul.f32 %v1038, 1.118034
    %v1071 = vmul.f32 %v1039, 1.118034
    %v1072 = vmul.f32 %v1040, 1.118034
    %v1073 = vmul.f32 %v1041, 1.118034
    %v1074 = vmul.f32 %v1042, 1.118034
    %v1075 = vmul.f32 %v757, %v1043
    %v1076 = vmul.f32 %v760, %v1044
    %v1077 = vmul.f32 %v765, %v1045
    %v1078 = vmul.f32 %v768, %v1046
    %v1079 = vmul.f32 %v773, %v1047
    %v1080 = vmul.f32 %v776, %v1048
    %v1081 = vmul.f32 %v781, %v1049
    %v1082 = vmul.f32 %v784, %v1050
    %v1083 = vmul.f32 %v789, %v1051
    %v1084 = vmul.f32 %v792, %v1052
    %v1085 = vmul.f32 %v797, %v1053
    %v1086 = vmul.f32 %v800, %v1054
    %v1087 = vmul.f32 %v805, %v1055
    %v1088 = vmul.f32 %v808, %v1056
    %v1089 = vmul.f32 %v813, %v1057
    %v1090 = vmul.f32 %v816, %v1058
    %v1091 = vmul.f32 %v821, %v1059
    %v1092 = vmul.f32 %v824, %v1060
    %v1093 = vmul.f32 %v829, %v1061
    %v1094 = vmul.f32 %v832, %v1062
    %v1095 = vmul.f32 %v837, %v1063
    %v1096 = vmul.f32 %v840, %v1064
    %v1097 = vmul.f32 %v845, %v1065
    %v1098 = vmul.f32 %v848, %v1066
    %v1099 = vmul.f32 %v853, %v1067
    %v1100 = vmul.f32 %v856, %v1068
    %v1101 = vmul.f32 %v861, %v1069
    %v1102 = vmul.f32 %v864, %v1070
    %v1103 = vmul.f32 %v869, %v1071
    %v1104 = vmul.f32 %v872, %v1072
    %v1105 = vmul.f32 %v877, %v1073
    %v1106 = vmul.f32 %v880, %v1074
    %v1107 = vpack.c.bf16 %v1076, %v1075
    %v1108 = vpack.c.bf16 %v1078, %v1077
    %v1109 = vpack.c.bf16 %v1080, %v1079
    %v1110 = vpack.c.bf16 %v1082, %v1081
    %v1111 = vpack.c.bf16 %v1084, %v1083
    %v1112 = vpack.c.bf16 %v1086, %v1085
    %v1113 = vpack.c.bf16 %v1088, %v1087
    %v1114 = vpack.c.bf16 %v1090, %v1089
    %v1115 = vpack.c.bf16 %v1092, %v1091
    %v1116 = vpack.c.bf16 %v1094, %v1093
    %v1117 = vpack.c.bf16 %v1096, %v1095
    %v1118 = vpack.c.bf16 %v1098, %v1097
    %v1119 = vpack.c.bf16 %v1100, %v1099
    %v1120 = vpack.c.bf16 %v1102, %v1101
    %v1121 = vpack.c.bf16 %v1104, %v1103
    %v1122 = vpack.c.bf16 %v1106, %v1105
    %v1139 = vunpack.c.l.b16 %v1107
    %v1140 = vunpack.c.h.b16 %v1107
    %v1141 = vunpack.c.l.b16 %v1108
    %v1142 = vunpack.c.h.b16 %v1108
    %v1143 = vunpack.c.l.b16 %v1109
    %v1144 = vunpack.c.h.b16 %v1109
    %v1145 = vunpack.c.l.b16 %v1110
    %v1146 = vunpack.c.h.b16 %v1110
    %v1147 = vunpack.c.l.b16 %v1111
    %v1148 = vunpack.c.h.b16 %v1111
    %v1149 = vunpack.c.l.b16 %v1112
    %v1150 = vunpack.c.h.b16 %v1112
    %v1151 = vunpack.c.l.b16 %v1113
    %v1152 = vunpack.c.h.b16 %v1113
    %v1153 = vunpack.c.l.b16 %v1114
    %v1154 = vunpack.c.h.b16 %v1114
    %v1155 = vunpack.c.l.b16 %v1115
    %v1156 = vunpack.c.h.b16 %v1115
    %v1157 = vunpack.c.l.b16 %v1116
    %v1158 = vunpack.c.h.b16 %v1116
    %v1159 = vunpack.c.l.b16 %v1117
    %v1160 = vunpack.c.h.b16 %v1117
    %v1161 = vunpack.c.l.b16 %v1118
    %v1162 = vunpack.c.h.b16 %v1118
    %v1163 = vunpack.c.l.b16 %v1119
    %v1164 = vunpack.c.h.b16 %v1119
    %v1165 = vunpack.c.l.b16 %v1120
    %v1166 = vunpack.c.h.b16 %v1120
    %v1167 = vunpack.c.l.b16 %v1121
    %v1168 = vunpack.c.h.b16 %v1121
    %v1169 = vunpack.c.l.b16 %v1122
    %v1170 = vunpack.c.h.b16 %v1122
    %v1171 = vpack.c.b16 %v1139, %v1139
    %v1172 = vpack.c.b16 %v1140, %v1140
    %v1173 = vpack.c.b16 %v1141, %v1141
    %v1174 = vpack.c.b16 %v1142, %v1142
    %v1175 = vpack.c.b16 %v1143, %v1143
    %v1176 = vpack.c.b16 %v1144, %v1144
    %v1177 = vpack.c.b16 %v1145, %v1145
    %v1178 = vpack.c.b16 %v1146, %v1146
    %v1179 = vpack.c.b16 %v1147, %v1147
    %v1180 = vpack.c.b16 %v1148, %v1148
    %v1181 = vpack.c.b16 %v1149, %v1149
    %v1182 = vpack.c.b16 %v1150, %v1150
    %v1183 = vpack.c.b16 %v1151, %v1151
    %v1184 = vpack.c.b16 %v1152, %v1152
    %v1185 = vpack.c.b16 %v1153, %v1153
    %v1186 = vpack.c.b16 %v1154, %v1154
    %v1187 = vpack.c.b16 %v1155, %v1155
    %v1188 = vpack.c.b16 %v1156, %v1156
    %v1189 = vpack.c.b16 %v1157, %v1157
    %v1190 = vpack.c.b16 %v1158, %v1158
    %v1191 = vpack.c.b16 %v1159, %v1159
    %v1192 = vpack.c.b16 %v1160, %v1160
    %v1193 = vpack.c.b16 %v1161, %v1161
    %v1194 = vpack.c.b16 %v1162, %v1162
    %v1195 = vpack.c.b16 %v1163, %v1163
    %v1196 = vpack.c.b16 %v1164, %v1164
    %v1197 = vpack.c.b16 %v1165, %v1165
    %v1198 = vpack.c.b16 %v1166, %v1166
    %v1199 = vpack.c.b16 %v1167, %v1167
    %v1200 = vpack.c.b16 %v1168, %v1168
    %v1201 = vpack.c.b16 %v1169, %v1169
    %v1202 = vpack.c.b16 %v1170, %v1170
    %1235 = vst [vmem:[#allocation10] sm:$0xf] %v1171
    %1236 = vst [vmem:[#allocation10 + $0x4] sm:$0xf] %v1172
    %1237 = vst [vmem:[#allocation10 + $0x8] sm:$0xf] %v1173
    %1238 = vst [vmem:[#allocation10 + $0xc] sm:$0xf] %v1174
    %1239 = vst [vmem:[#allocation10 + $0x10] sm:$0xf] %v1175
    %1240 = vst [vmem:[#allocation10 + $0x14] sm:$0xf] %v1176
    %1241 = vst [vmem:[#allocation10 + $0x18] sm:$0xf] %v1177
    %1242 = vst [vmem:[#allocation10 + $0x1c] sm:$0xf] %v1178
    %1243 = vst [vmem:[#allocation10 + $0x20] sm:$0xf] %v1179
    %1244 = vst [vmem:[#allocation10 + $0x24] sm:$0xf] %v1180
    %1245 = vst [vmem:[#allocation10 + $0x28] sm:$0xf] %v1181
    %1246 = vst [vmem:[#allocation10 + $0x2c] sm:$0xf] %v1182
    %1247 = vst [vmem:[#allocation10 + $0x30] sm:$0xf] %v1183
    %1248 = vst [vmem:[#allocation10 + $0x34] sm:$0xf] %v1184
    %1249 = vst [vmem:[#allocation10 + $0x38] sm:$0xf] %v1185
    %1250 = vst [vmem:[#allocation10 + $0x3c] sm:$0xf] %v1186
    %1251 = vst [vmem:[#allocation10 + $0x40] sm:$0xf] %v1187
    %1252 = vst [vmem:[#allocation10 + $0x44] sm:$0xf] %v1188
    %1253 = vst [vmem:[#allocation10 + $0x48] sm:$0xf] %v1189
    %1254 = vst [vmem:[#allocation10 + $0x4c] sm:$0xf] %v1190
    %1255 = vst [vmem:[#allocation10 + $0x50] sm:$0xf] %v1191
    %1256 = vst [vmem:[#allocation10 + $0x54] sm:$0xf] %v1192
    %1257 = vst [vmem:[#allocation10 + $0x58] sm:$0xf] %v1193
    %1258 = vst [vmem:[#allocation10 + $0x5c] sm:$0xf] %v1194
    %1259 = vst [vmem:[#allocation10 + $0x60] sm:$0xf] %v1195
    %1260 = vst [vmem:[#allocation10 + $0x64] sm:$0xf] %v1196
    %1261 = vst [vmem:[#allocation10 + $0x68] sm:$0xf] %v1197
    %1262 = vst [vmem:[#allocation10 + $0x6c] sm:$0xf] %v1198
    %1263 = vst [vmem:[#allocation10 + $0x70] sm:$0xf] %v1199
    %1264 = vst [vmem:[#allocation10 + $0x74] sm:$0xf] %v1200
    %1265 = vst [vmem:[#allocation10 + $0x78] sm:$0xf] %v1201
    %1266 = vst [vmem:[#allocation10 + $0x7c] sm:$0xf] %v1202
    %v1267 = vld [vmem:[#allocation5] sm:$0xf]
    %v1268 = vld [vmem:[#allocation5 + $0x4] sm:$0xf]
    %v1269 = vld [vmem:[#allocation5 + $0x8] sm:$0xf]
    %v1270 = vld [vmem:[#allocation5 + $0xc] sm:$0xf]
    %v1271 = vld [vmem:[#allocation5 + $0x10] sm:$0xf]
    %v1272 = vld [vmem:[#allocation5 + $0x14] sm:$0xf]
    %v1273 = vld [vmem:[#allocation5 + $0x18] sm:$0xf]
    %v1274 = vld [vmem:[#allocation5 + $0x1c] sm:$0xf]
    %v1275 = vld [vmem:[#allocation5 + $0x20] sm:$0xf]
    %v1276 = vld [vmem:[#allocation5 + $0x24] sm:$0xf]
    %v1277 = vld [vmem:[#allocation5 + $0x28] sm:$0xf]
    %v1278 = vld [vmem:[#allocation5 + $0x2c] sm:$0xf]
    %v1279 = vld [vmem:[#allocation5 + $0x30] sm:$0xf]
    %v1280 = vld [vmem:[#allocation5 + $0x34] sm:$0xf]
    %v1281 = vld [vmem:[#allocation5 + $0x38] sm:$0xf]
    %v1282 = vld [vmem:[#allocation5 + $0x3c] sm:$0xf]
    %v1283 = vld [vmem:[#allocation5 + $0x40] sm:$0xf]
    %v1284 = vld [vmem:[#allocation5 + $0x44] sm:$0xf]
    %v1285 = vld [vmem:[#allocation5 + $0x48] sm:$0xf]
    %v1286 = vld [vmem:[#allocation5 + $0x4c] sm:$0xf]
    %v1287 = vld [vmem:[#allocation5 + $0x50] sm:$0xf]
    %v1288 = vld [vmem:[#allocation5 + $0x54] sm:$0xf]
    %v1289 = vld [vmem:[#allocation5 + $0x58] sm:$0xf]
    %v1290 = vld [vmem:[#allocation5 + $0x5c] sm:$0xf]
    %v1291 = vld [vmem:[#allocation5 + $0x60] sm:$0xf]
    %v1292 = vld [vmem:[#allocation5 + $0x64] sm:$0xf]
    %v1293 = vld [vmem:[#allocation5 + $0x68] sm:$0xf]
    %v1294 = vld [vmem:[#allocation5 + $0x6c] sm:$0xf]
    %v1295 = vld [vmem:[#allocation5 + $0x70] sm:$0xf]
    %v1296 = vld [vmem:[#allocation5 + $0x74] sm:$0xf]
    %v1297 = vld [vmem:[#allocation5 + $0x78] sm:$0xf]
    %v1298 = vld [vmem:[#allocation5 + $0x7c] sm:$0xf]
    %v1331 = vunpack.c.l.b16 %v1267
    %v1332 = vunpack.c.l.b16 %v1268
    %v1333 = vunpack.c.l.b16 %v1269
    %v1334 = vunpack.c.l.b16 %v1270
    %v1335 = vunpack.c.l.b16 %v1271
    %v1336 = vunpack.c.l.b16 %v1272
    %v1337 = vunpack.c.l.b16 %v1273
    %v1338 = vunpack.c.l.b16 %v1274
    %v1339 = vunpack.c.l.b16 %v1275
    %v1340 = vunpack.c.l.b16 %v1276
    %v1341 = vunpack.c.l.b16 %v1277
    %v1342 = vunpack.c.l.b16 %v1278
    %v1343 = vunpack.c.l.b16 %v1279
    %v1344 = vunpack.c.l.b16 %v1280
    %v1345 = vunpack.c.l.b16 %v1281
    %v1346 = vunpack.c.l.b16 %v1282
    %v1347 = vunpack.c.l.b16 %v1283
    %v1348 = vunpack.c.l.b16 %v1284
    %v1349 = vunpack.c.l.b16 %v1285
    %v1350 = vunpack.c.l.b16 %v1286
    %v1351 = vunpack.c.l.b16 %v1287
    %v1352 = vunpack.c.l.b16 %v1288
    %v1353 = vunpack.c.l.b16 %v1289
    %v1354 = vunpack.c.l.b16 %v1290
    %v1355 = vunpack.c.l.b16 %v1291
    %v1356 = vunpack.c.l.b16 %v1292
    %v1357 = vunpack.c.l.b16 %v1293
    %v1358 = vunpack.c.l.b16 %v1294
    %v1359 = vunpack.c.l.b16 %v1295
    %v1360 = vunpack.c.l.b16 %v1296
    %v1361 = vunpack.c.l.b16 %v1297
    %v1362 = vunpack.c.l.b16 %v1298
    %v1363 = vpack.c.b16 %v1332, %v1331
    %v1364 = vpack.c.b16 %v1334, %v1333
    %v1365 = vpack.c.b16 %v1336, %v1335
    %v1366 = vpack.c.b16 %v1338, %v1337
    %v1367 = vpack.c.b16 %v1340, %v1339
    %v1368 = vpack.c.b16 %v1342, %v1341
    %v1369 = vpack.c.b16 %v1344, %v1343
    %v1370 = vpack.c.b16 %v1346, %v1345
    %v1371 = vpack.c.b16 %v1348, %v1347
    %v1372 = vpack.c.b16 %v1350, %v1349
    %v1373 = vpack.c.b16 %v1352, %v1351
    %v1374 = vpack.c.b16 %v1354, %v1353
    %v1375 = vpack.c.b16 %v1356, %v1355
    %v1376 = vpack.c.b16 %v1358, %v1357
    %v1377 = vpack.c.b16 %v1360, %v1359
    %v1378 = vpack.c.b16 %v1362, %v1361
    %1395 = vmatprep.subr.bf16.mxu0 0
    %1396 = vmatpush1.bf16.msra.mxu0 %v283
    %1397 = vmatprep.subr.bf16.mxu0 0
    %1398 = vmatpush1.bf16.msra.mxu0 %v284
    %1399 = vmatprep.subr.bf16.mxu0 0
    %1400 = vmatpush1.bf16.msra.mxu0 %v285
    %1401 = vmatprep.subr.bf16.mxu0 0
    %1402 = vmatpush1.bf16.msra.mxu0 %v286
    %1403 = vmatprep.subr.bf16.mxu0 0
    %1404 = vmatpush1.bf16.msra.mxu0 %v287
    %1405 = vmatprep.subr.bf16.mxu0 0
    %1406 = vmatpush1.bf16.msra.mxu0 %v288
    %1407 = vmatprep.subr.bf16.mxu0 0
    %1408 = vmatpush1.bf16.msra.mxu0 %v289
    %1409 = vmatprep.subr.bf16.mxu0 0
    %1410 = vmatpush1.bf16.msra.mxu0 %v290
    %1411 = vmatprep.subr.bf16.mxu0 0
    %1412 = vmatpush1.bf16.msra.mxu0 0
    %1413 = vmatprep.subr.bf16.mxu0 0
    %1414 = vmatpush1.bf16.msra.mxu0 0
    %1415 = vmatprep.subr.bf16.mxu0 0
    %1416 = vmatpush1.bf16.msra.mxu0 0
    %1417 = vmatprep.subr.bf16.mxu0 0
    %1418 = vmatpush1.bf16.msra.mxu0 0
    %1419 = vmatprep.subr.bf16.mxu0 0
    %1420 = vmatpush1.bf16.msra.mxu0 0
    %1421 = vmatprep.subr.bf16.mxu0 0
    %1422 = vmatpush1.bf16.msra.mxu0 0
    %1423 = vmatprep.subr.bf16.mxu0 0
    %1424 = vmatpush1.bf16.msra.mxu0 0
    %1425 = vmatprep.subr.bf16.mxu0 0
    %1426 = vmatpush1.bf16.msra.mxu0 0
    %1427 = vmatprep.mubr.bf16.mxu0 0
    %1428 = vmatmul.mubr.bf16.gmra.mrb[0].mxu0 %v1363
    %v1429 = vpop.f32.mrb[0].mxu0
    %v1430 = vadd.f32 %v153, %v1429
    %v1431 = vpop.f32.mrb[0].mxu0
    %v1432 = vpop.f32.mrb[0].mxu0
    %v1433 = vadd.f32 %v153, %v1432
    %v1434 = vpop.f32.mrb[0].mxu0
    %1435 = vmatprep.mubr.bf16.mxu0 0
    %1436 = vmatmul.mubr.bf16.gmra.mrb[0].mxu0 %v1364
    %v1437 = vpop.f32.mrb[0].mxu0
    %v1438 = vadd.f32 %v153, %v1437
    %v1439 = vpop.f32.mrb[0].mxu0
    %v1440 = vpop.f32.mrb[0].mxu0
    %v1441 = vadd.f32 %v153, %v1440
    %v1442 = vpop.f32.mrb[0].mxu0
    %1443 = vmatprep.mubr.bf16.mxu0 0
    %1444 = vmatmul.mubr.bf16.gmra.mrb[0].mxu0 %v1365
    %v1445 = vpop.f32.mrb[0].mxu0
    %v1446 = vadd.f32 %v153, %v1445
    %v1447 = vpop.f32.mrb[0].mxu0
    %v1448 = vpop.f32.mrb[0].mxu0
    %v1449 = vadd.f32 %v153, %v1448
    %v1450 = vpop.f32.mrb[0].mxu0
    %1451 = vmatprep.mubr.bf16.mxu0 0
    %1452 = vmatmul.mubr.bf16.gmra.mrb[0].mxu0 %v1366
    %v1453 = vpop.f32.mrb[0].mxu0
    %v1454 = vadd.f32 %v153, %v1453
    %v1455 = vpop.f32.mrb[0].mxu0
    %v1456 = vpop.f32.mrb[0].mxu0
    %v1457 = vadd.f32 %v153, %v1456
    %v1458 = vpop.f32.mrb[0].mxu0
    %1459 = vmatprep.mubr.bf16.mxu0 0
    %1460 = vmatmul.mubr.bf16.gmra.mrb[0].mxu0 %v1367
    %v1461 = vpop.f32.mrb[0].mxu0
    %v1462 = vadd.f32 %v153, %v1461
    %v1463 = vpop.f32.mrb[0].mxu0
    %v1464 = vpop.f32.mrb[0].mxu0
    %v1465 = vadd.f32 %v153, %v1464
    %v1466 = vpop.f32.mrb[0].mxu0
    %1467 = vmatprep.mubr.bf16.mxu0 0
    %1468 = vmatmul.mubr.bf16.gmra.mrb[0].mxu0 %v1368
    %v1469 = vpop.f32.mrb[0].mxu0
    %v1470 = vadd.f32 %v153, %v1469
    %v1471 = vpop.f32.mrb[0].mxu0
    %v1472 = vpop.f32.mrb[0].mxu0
    %v1473 = vadd.f32 %v153, %v1472
    %v1474 = vpop.f32.mrb[0].mxu0
    %1475 = vmatprep.mubr.bf16.mxu0 0
    %1476 = vmatmul.mubr.bf16.gmra.mrb[0].mxu0 %v1369
    %v1477 = vpop.f32.mrb[0].mxu0
    %v1478 = vadd.f32 %v153, %v1477
    %v1479 = vpop.f32.mrb[0].mxu0
    %v1480 = vpop.f32.mrb[0].mxu0
    %v1481 = vadd.f32 %v153, %v1480
    %v1482 = vpop.f32.mrb[0].mxu0
    %1483 = vmatprep.mubr.bf16.mxu0 0
    %1484 = vmatmul.mubr.bf16.gmra.mrb[0].mxu0 %v1370
    %v1485 = vpop.f32.mrb[0].mxu0
    %v1486 = vadd.f32 %v153, %v1485
    %v1487 = vpop.f32.mrb[0].mxu0
    %v1488 = vpop.f32.mrb[0].mxu0
    %v1489 = vadd.f32 %v153, %v1488
    %v1490 = vpop.f32.mrb[0].mxu0
    %1491 = vmatprep.mubr.bf16.mxu0 0
    %1492 = vmatmul.mubr.bf16.gmra.mrb[0].mxu0 %v1371
    %v1493 = vpop.f32.mrb[0].mxu0
    %v1494 = vadd.f32 %v153, %v1493
    %v1495 = vpop.f32.mrb[0].mxu0
    %v1496 = vpop.f32.mrb[0].mxu0
    %v1497 = vadd.f32 %v153, %v1496
    %v1498 = vpop.f32.mrb[0].mxu0
    %1499 = vmatprep.mubr.bf16.mxu0 0
    %1500 = vmatmul.mubr.bf16.gmra.mrb[0].mxu0 %v1372
    %v1501 = vpop.f32.mrb[0].mxu0
    %v1502 = vadd.f32 %v153, %v1501
    %v1503 = vpop.f32.mrb[0].mxu0
    %v1504 = vpop.f32.mrb[0].mxu0
    %v1505 = vadd.f32 %v153, %v1504
    %v1506 = vpop.f32.mrb[0].mxu0
    %1507 = vmatprep.mubr.bf16.mxu0 0
    %1508 = vmatmul.mubr.bf16.gmra.mrb[0].mxu0 %v1373
    %v1509 = vpop.f32.mrb[0].mxu0
    %v1510 = vadd.f32 %v153, %v1509
    %v1511 = vpop.f32.mrb[0].mxu0
    %v1512 = vpop.f32.mrb[0].mxu0
    %v1513 = vadd.f32 %v153, %v1512
    %v1514 = vpop.f32.mrb[0].mxu0
    %1515 = vmatprep.mubr.bf16.mxu0 0
    %1516 = vmatmul.mubr.bf16.gmra.mrb[0].mxu0 %v1374
    %v1517 = vpop.f32.mrb[0].mxu0
    %v1518 = vadd.f32 %v153, %v1517
    %v1519 = vpop.f32.mrb[0].mxu0
    %v1520 = vpop.f32.mrb[0].mxu0
    %v1521 = vadd.f32 %v153, %v1520
    %v1522 = vpop.f32.mrb[0].mxu0
    %1523 = vmatprep.mubr.bf16.mxu0 0
    %1524 = vmatmul.mubr.bf16.gmra.mrb[0].mxu0 %v1375
    %v1525 = vpop.f32.mrb[0].mxu0
    %v1526 = vadd.f32 %v153, %v1525
    %v1527 = vpop.f32.mrb[0].mxu0
    %v1528 = vpop.f32.mrb[0].mxu0
    %v1529 = vadd.f32 %v153, %v1528
    %v1530 = vpop.f32.mrb[0].mxu0
    %1531 = vmatprep.mubr.bf16.mxu0 0
    %1532 = vmatmul.mubr.bf16.gmra.mrb[0].mxu0 %v1376
    %v1533 = vpop.f32.mrb[0].mxu0
    %v1534 = vadd.f32 %v153, %v1533
    %v1535 = vpop.f32.mrb[0].mxu0
    %v1536 = vpop.f32.mrb[0].mxu0
    %v1537 = vadd.f32 %v153, %v1536
    %v1538 = vpop.f32.mrb[0].mxu0
    %1539 = vmatprep.mubr.bf16.mxu0 0
    %1540 = vmatmul.mubr.bf16.gmra.mrb[0].mxu0 %v1377
    %v1541 = vpop.f32.mrb[0].mxu0
    %v1542 = vadd.f32 %v153, %v1541
    %v1543 = vpop.f32.mrb[0].mxu0
    %v1544 = vpop.f32.mrb[0].mxu0
    %v1545 = vadd.f32 %v153, %v1544
    %v1546 = vpop.f32.mrb[0].mxu0
    %1547 = vmatprep.mubr.bf16.mxu0 0
    %1548 = vmatmul.mubr.bf16.gmra.mrb[0].mxu0 %v1378
    %v1549 = vpop.f32.mrb[0].mxu0
    %v1550 = vadd.f32 %v153, %v1549
    %v1551 = vpop.f32.mrb[0].mxu0
    %v1552 = vpop.f32.mrb[0].mxu0
    %v1553 = vadd.f32 %v153, %v1552
    %v1554 = vpop.f32.mrb[0].mxu0
    %1555 = vdwg.mxu0
    %vm1556 = vcmp.gt.f32.partialorder %v1430, 0.0
    %vm1557 = vcmp.gt.f32.partialorder %v1433, 0.0
    %vm1558 = vcmp.gt.f32.partialorder %v1438, 0.0
    %vm1559 = vcmp.gt.f32.partialorder %v1441, 0.0
    %vm1560 = vcmp.gt.f32.partialorder %v1446, 0.0
    %vm1561 = vcmp.gt.f32.partialorder %v1449, 0.0
    %vm1562 = vcmp.gt.f32.partialorder %v1454, 0.0
    %vm1563 = vcmp.gt.f32.partialorder %v1457, 0.0
    %vm1564 = vcmp.gt.f32.partialorder %v1462, 0.0
    %vm1565 = vcmp.gt.f32.partialorder %v1465, 0.0
    %vm1566 = vcmp.gt.f32.partialorder %v1470, 0.0
    %vm1567 = vcmp.gt.f32.partialorder %v1473, 0.0
    %vm1568 = vcmp.gt.f32.partialorder %v1478, 0.0
    %vm1569 = vcmp.gt.f32.partialorder %v1481, 0.0
    %vm1570 = vcmp.gt.f32.partialorder %v1486, 0.0
    %vm1571 = vcmp.gt.f32.partialorder %v1489, 0.0
    %vm1572 = vcmp.gt.f32.partialorder %v1494, 0.0
    %vm1573 = vcmp.gt.f32.partialorder %v1497, 0.0
    %vm1574 = vcmp.gt.f32.partialorder %v1502, 0.0
    %vm1575 = vcmp.gt.f32.partialorder %v1505, 0.0
    %vm1576 = vcmp.gt.f32.partialorder %v1510, 0.0
    %vm1577 = vcmp.gt.f32.partialorder %v1513, 0.0
    %vm1578 = vcmp.gt.f32.partialorder %v1518, 0.0
    %vm1579 = vcmp.gt.f32.partialorder %v1521, 0.0
    %vm1580 = vcmp.gt.f32.partialorder %v1526, 0.0
    %vm1581 = vcmp.gt.f32.partialorder %v1529, 0.0
    %vm1582 = vcmp.gt.f32.partialorder %v1534, 0.0
    %vm1583 = vcmp.gt.f32.partialorder %v1537, 0.0
    %vm1584 = vcmp.gt.f32.partialorder %v1542, 0.0
    %vm1585 = vcmp.gt.f32.partialorder %v1545, 0.0
    %vm1586 = vcmp.gt.f32.partialorder %v1550, 0.0
    %vm1587 = vcmp.gt.f32.partialorder %v1553, 0.0
    %v1588 = vmin.f32 %v1430, 0.0
    %v1589 = vmin.f32 %v1433, 0.0
    %v1590 = vmin.f32 %v1438, 0.0
    %v1591 = vmin.f32 %v1441, 0.0
    %v1592 = vmin.f32 %v1446, 0.0
    %v1593 = vmin.f32 %v1449, 0.0
    %v1594 = vmin.f32 %v1454, 0.0
    %v1595 = vmin.f32 %v1457, 0.0
    %v1596 = vmin.f32 %v1462, 0.0
    %v1597 = vmin.f32 %v1465, 0.0
    %v1598 = vmin.f32 %v1470, 0.0
    %v1599 = vmin.f32 %v1473, 0.0
    %v1600 = vmin.f32 %v1478, 0.0
    %v1601 = vmin.f32 %v1481, 0.0
    %v1602 = vmin.f32 %v1486, 0.0
    %v1603 = vmin.f32 %v1489, 0.0
    %v1604 = vmin.f32 %v1494, 0.0
    %v1605 = vmin.f32 %v1497, 0.0
    %v1606 = vmin.f32 %v1502, 0.0
    %v1607 = vmin.f32 %v1505, 0.0
    %v1608 = vmin.f32 %v1510, 0.0
    %v1609 = vmin.f32 %v1513, 0.0
    %v1610 = vmin.f32 %v1518, 0.0
    %v1611 = vmin.f32 %v1521, 0.0
    %v1612 = vmin.f32 %v1526, 0.0
    %v1613 = vmin.f32 %v1529, 0.0
    %v1614 = vmin.f32 %v1534, 0.0
    %v1615 = vmin.f32 %v1537, 0.0
    %v1616 = vmin.f32 %v1542, 0.0
    %v1617 = vmin.f32 %v1545, 0.0
    %v1618 = vmin.f32 %v1550, 0.0
    %v1619 = vmin.f32 %v1553, 0.0
    %v1620 = vmul.f32 %v1588, 1.442695
    %v1621 = vpow.pop %v1620
    %v1622 = vmul.f32 %v1589, 1.442695
    %v1623 = vpow.pop %v1622
    %v1624 = vmul.f32 %v1590, 1.442695
    %v1625 = vpow.pop %v1624
    %v1626 = vmul.f32 %v1591, 1.442695
    %v1627 = vpow.pop %v1626
    %v1628 = vmul.f32 %v1592, 1.442695
    %v1629 = vpow.pop %v1628
    %v1630 = vmul.f32 %v1593, 1.442695
    %v1631 = vpow.pop %v1630
    %v1632 = vmul.f32 %v1594, 1.442695
    %v1633 = vpow.pop %v1632
    %v1634 = vmul.f32 %v1595, 1.442695
    %v1635 = vpow.pop %v1634
    %v1636 = vmul.f32 %v1596, 1.442695
    %v1637 = vpow.pop %v1636
    %v1638 = vmul.f32 %v1597, 1.442695
    %v1639 = vpow.pop %v1638
    %v1640 = vmul.f32 %v1598, 1.442695
    %v1641 = vpow.pop %v1640
    %v1642 = vmul.f32 %v1599, 1.442695
    %v1643 = vpow.pop %v1642
    %v1644 = vmul.f32 %v1600, 1.442695
    %v1645 = vpow.pop %v1644
    %v1646 = vmul.f32 %v1601, 1.442695
    %v1647 = vpow.pop %v1646
    %v1648 = vmul.f32 %v1602, 1.442695
    %v1649 = vpow.pop %v1648
    %v1650 = vmul.f32 %v1603, 1.442695
    %v1651 = vpow.pop %v1650
    %v1652 = vmul.f32 %v1604, 1.442695
    %v1653 = vpow.pop %v1652
    %v1654 = vmul.f32 %v1605, 1.442695
    %v1655 = vpow.pop %v1654
    %v1656 = vmul.f32 %v1606, 1.442695
    %v1657 = vpow.pop %v1656
    %v1658 = vmul.f32 %v1607, 1.442695
    %v1659 = vpow.pop %v1658
    %v1660 = vmul.f32 %v1608, 1.442695
    %v1661 = vpow.pop %v1660
    %v1662 = vmul.f32 %v1609, 1.442695
    %v1663 = vpow.pop %v1662
    %v1664 = vmul.f32 %v1610, 1.442695
    %v1665 = vpow.pop %v1664
    %v1666 = vmul.f32 %v1611, 1.442695
    %v1667 = vpow.pop %v1666
    %v1668 = vmul.f32 %v1612, 1.442695
    %v1669 = vpow.pop %v1668
    %v1670 = vmul.f32 %v1613, 1.442695
    %v1671 = vpow.pop %v1670
    %v1672 = vmul.f32 %v1614, 1.442695
    %v1673 = vpow.pop %v1672
    %v1674 = vmul.f32 %v1615, 1.442695
    %v1675 = vpow.pop %v1674
    %v1676 = vmul.f32 %v1616, 1.442695
    %v1677 = vpow.pop %v1676
    %v1678 = vmul.f32 %v1617, 1.442695
    %v1679 = vpow.pop %v1678
    %v1680 = vmul.f32 %v1618, 1.442695
    %v1681 = vpow.pop %v1680
    %v1682 = vmul.f32 %v1619, 1.442695
    %v1683 = vpow.pop %v1682
    %v1684 = vsub.f32 %v1621, 1.0
    %v1685 = vsub.f32 %v1623, 1.0
    %v1686 = vsub.f32 %v1625, 1.0
    %v1687 = vsub.f32 %v1627, 1.0
    %v1688 = vsub.f32 %v1629, 1.0
    %v1689 = vsub.f32 %v1631, 1.0
    %v1690 = vsub.f32 %v1633, 1.0
    %v1691 = vsub.f32 %v1635, 1.0
    %v1692 = vsub.f32 %v1637, 1.0
    %v1693 = vsub.f32 %v1639, 1.0
    %v1694 = vsub.f32 %v1641, 1.0
    %v1695 = vsub.f32 %v1643, 1.0
    %v1696 = vsub.f32 %v1645, 1.0
    %v1697 = vsub.f32 %v1647, 1.0
    %v1698 = vsub.f32 %v1649, 1.0
    %v1699 = vsub.f32 %v1651, 1.0
    %v1700 = vsub.f32 %v1653, 1.0
    %v1701 = vsub.f32 %v1655, 1.0
    %v1702 = vsub.f32 %v1657, 1.0
    %v1703 = vsub.f32 %v1659, 1.0
    %v1704 = vsub.f32 %v1661, 1.0
    %v1705 = vsub.f32 %v1663, 1.0
    %v1706 = vsub.f32 %v1665, 1.0
    %v1707 = vsub.f32 %v1667, 1.0
    %v1708 = vsub.f32 %v1669, 1.0
    %v1709 = vsub.f32 %v1671, 1.0
    %v1710 = vsub.f32 %v1673, 1.0
    %v1711 = vsub.f32 %v1675, 1.0
    %v1712 = vsub.f32 %v1677, 1.0
    %v1713 = vsub.f32 %v1679, 1.0
    %v1714 = vsub.f32 %v1681, 1.0
    %v1715 = vsub.f32 %v1683, 1.0
    %v1716 = vsel %vm1556, %v1430, %v1684
    %v1717 = vsel %vm1557, %v1433, %v1685
    %v1718 = vsel %vm1558, %v1438, %v1686
    %v1719 = vsel %vm1559, %v1441, %v1687
    %v1720 = vsel %vm1560, %v1446, %v1688
    %v1721 = vsel %vm1561, %v1449, %v1689
    %v1722 = vsel %vm1562, %v1454, %v1690
    %v1723 = vsel %vm1563, %v1457, %v1691
    %v1724 = vsel %vm1564, %v1462, %v1692
    %v1725 = vsel %vm1565, %v1465, %v1693
    %v1726 = vsel %vm1566, %v1470, %v1694
    %v1727 = vsel %vm1567, %v1473, %v1695
    %v1728 = vsel %vm1568, %v1478, %v1696
    %v1729 = vsel %vm1569, %v1481, %v1697
    %v1730 = vsel %vm1570, %v1486, %v1698
    %v1731 = vsel %vm1571, %v1489, %v1699
    %v1732 = vsel %vm1572, %v1494, %v1700
    %v1733 = vsel %vm1573, %v1497, %v1701
    %v1734 = vsel %vm1574, %v1502, %v1702
    %v1735 = vsel %vm1575, %v1505, %v1703
    %v1736 = vsel %vm1576, %v1510, %v1704
    %v1737 = vsel %vm1577, %v1513, %v1705
    %v1738 = vsel %vm1578, %v1518, %v1706
    %v1739 = vsel %vm1579, %v1521, %v1707
    %v1740 = vsel %vm1580, %v1526, %v1708
    %v1741 = vsel %vm1581, %v1529, %v1709
    %v1742 = vsel %vm1582, %v1534, %v1710
    %v1743 = vsel %vm1583, %v1537, %v1711
    %v1744 = vsel %vm1584, %v1542, %v1712
    %v1745 = vsel %vm1585, %v1545, %v1713
    %v1746 = vsel %vm1586, %v1550, %v1714
    %v1747 = vsel %vm1587, %v1553, %v1715
    %v1748 = vpack.c.bf16 %v1717, %v1716
    %v1749 = vpack.c.bf16 %v1719, %v1718
    %v1750 = vpack.c.bf16 %v1721, %v1720
    %v1751 = vpack.c.bf16 %v1723, %v1722
    %v1752 = vpack.c.bf16 %v1725, %v1724
    %v1753 = vpack.c.bf16 %v1727, %v1726
    %v1754 = vpack.c.bf16 %v1729, %v1728
    %v1755 = vpack.c.bf16 %v1731, %v1730
    %v1756 = vpack.c.bf16 %v1733, %v1732
    %v1757 = vpack.c.bf16 %v1735, %v1734
    %v1758 = vpack.c.bf16 %v1737, %v1736
    %v1759 = vpack.c.bf16 %v1739, %v1738
    %v1760 = vpack.c.bf16 %v1741, %v1740
    %v1761 = vpack.c.bf16 %v1743, %v1742
    %v1762 = vpack.c.bf16 %v1745, %v1744
    %v1763 = vpack.c.bf16 %v1747, %v1746
    %1764 = vmatprep.subr.bf16.mxu0 0
    %1765 = vmatpush1.bf16.msra.mxu0 %v706
    %1766 = vmatprep.subr.bf16.mxu0 0
    %1767 = vmatpush1.bf16.msra.mxu0 %v707
    %1768 = vmatprep.subr.bf16.mxu0 0
    %1769 = vmatpush1.bf16.msra.mxu0 %v708
    %1770 = vmatprep.subr.bf16.mxu0 0
    %1771 = vmatpush1.bf16.msra.mxu0 %v709
    %1772 = vmatprep.subr.bf16.mxu0 0
    %1773 = vmatpush1.bf16.msra.mxu0 %v710
    %1774 = vmatprep.subr.bf16.mxu0 0
    %1775 = vmatpush1.bf16.msra.mxu0 %v711
    %1776 = vmatprep.subr.bf16.mxu0 0
    %1777 = vmatpush1.bf16.msra.mxu0 %v712
    %1778 = vmatprep.subr.bf16.mxu0 0
    %1779 = vmatpush1.bf16.msra.mxu0 %v713
    %1780 = vmatprep.subr.bf16.mxu0 0
    %1781 = vmatpush1.bf16.msra.mxu0 0
    %1782 = vmatprep.subr.bf16.mxu0 0
    %1783 = vmatpush1.bf16.msra.mxu0 0
    %1784 = vmatprep.subr.bf16.mxu0 0
    %1785 = vmatpush1.bf16.msra.mxu0 0
    %1786 = vmatprep.subr.bf16.mxu0 0
    %1787 = vmatpush1.bf16.msra.mxu0 0
    %1788 = vmatprep.subr.bf16.mxu0 0
    %1789 = vmatpush1.bf16.msra.mxu0 0
    %1790 = vmatprep.subr.bf16.mxu0 0
    %1791 = vmatpush1.bf16.msra.mxu0 0
    %1792 = vmatprep.subr.bf16.mxu0 0
    %1793 = vmatpush1.bf16.msra.mxu0 0
    %1794 = vmatprep.subr.bf16.mxu0 0
    %1795 = vmatpush1.bf16.msra.mxu0 0
    %1796 = vmatprep.mubr.bf16.mxu0 0
    %1797 = vmatmul.mubr.bf16.gmra.mrb[0].mxu0 %v1748
    %v1798 = vpop.f32.mrb[0].mxu0
    %v1799 = vadd.f32 %v672, %v1798
    %v1800 = vpop.f32.mrb[0].mxu0
    %v1801 = vpop.f32.mrb[0].mxu0
    %v1802 = vadd.f32 %v672, %v1801
    %v1803 = vpop.f32.mrb[0].mxu0
    %1804 = vmatprep.mubr.bf16.mxu0 0
    %1805 = vmatmul.mubr.bf16.gmra.mrb[0].mxu0 %v1749
    %v1806 = vpop.f32.mrb[0].mxu0
    %v1807 = vadd.f32 %v672, %v1806
    %v1808 = vpop.f32.mrb[0].mxu0
    %v1809 = vpop.f32.mrb[0].mxu0
    %v1810 = vadd.f32 %v672, %v1809
    %v1811 = vpop.f32.mrb[0].mxu0
    %1812 = vmatprep.mubr.bf16.mxu0 0
    %1813 = vmatmul.mubr.bf16.gmra.mrb[0].mxu0 %v1750
    %v1814 = vpop.f32.mrb[0].mxu0
    %v1815 = vadd.f32 %v672, %v1814
    %v1816 = vpop.f32.mrb[0].mxu0
    %v1817 = vpop.f32.mrb[0].mxu0
    %v1818 = vadd.f32 %v672, %v1817
    %v1819 = vpop.f32.mrb[0].mxu0
    %1820 = vmatprep.mubr.bf16.mxu0 0
    %1821 = vmatmul.mubr.bf16.gmra.mrb[0].mxu0 %v1751
    %v1822 = vpop.f32.mrb[0].mxu0
    %v1823 = vadd.f32 %v672, %v1822
    %v1824 = vpop.f32.mrb[0].mxu0
    %v1825 = vpop.f32.mrb[0].mxu0
    %v1826 = vadd.f32 %v672, %v1825
    %v1827 = vpop.f32.mrb[0].mxu0
    %1828 = vmatprep.mubr.bf16.mxu0 0
    %1829 = vmatmul.mubr.bf16.gmra.mrb[0].mxu0 %v1752
    %v1830 = vpop.f32.mrb[0].mxu0
    %v1831 = vadd.f32 %v672, %v1830
    %v1832 = vpop.f32.mrb[0].mxu0
    %v1833 = vpop.f32.mrb[0].mxu0
    %v1834 = vadd.f32 %v672, %v1833
    %v1835 = vpop.f32.mrb[0].mxu0
    %1836 = vmatprep.mubr.bf16.mxu0 0
    %1837 = vmatmul.mubr.bf16.gmra.mrb[0].mxu0 %v1753
    %v1838 = vpop.f32.mrb[0].mxu0
    %v1839 = vadd.f32 %v672, %v1838
    %v1840 = vpop.f32.mrb[0].mxu0
    %v1841 = vpop.f32.mrb[0].mxu0
    %v1842 = vadd.f32 %v672, %v1841
    %v1843 = vpop.f32.mrb[0].mxu0
    %1844 = vmatprep.mubr.bf16.mxu0 0
    %1845 = vmatmul.mubr.bf16.gmra.mrb[0].mxu0 %v1754
    %v1846 = vpop.f32.mrb[0].mxu0
    %v1847 = vadd.f32 %v672, %v1846
    %v1848 = vpop.f32.mrb[0].mxu0
    %v1849 = vpop.f32.mrb[0].mxu0
    %v1850 = vadd.f32 %v672, %v1849
    %v1851 = vpop.f32.mrb[0].mxu0
    %1852 = vmatprep.mubr.bf16.mxu0 0
    %1853 = vmatmul.mubr.bf16.gmra.mrb[0].mxu0 %v1755
    %v1854 = vpop.f32.mrb[0].mxu0
    %v1855 = vadd.f32 %v672, %v1854
    %v1856 = vpop.f32.mrb[0].mxu0
    %v1857 = vpop.f32.mrb[0].mxu0
    %v1858 = vadd.f32 %v672, %v1857
    %v1859 = vpop.f32.mrb[0].mxu0
    %1860 = vmatprep.mubr.bf16.mxu0 0
    %1861 = vmatmul.mubr.bf16.gmra.mrb[0].mxu0 %v1756
    %v1862 = vpop.f32.mrb[0].mxu0
    %v1863 = vadd.f32 %v672, %v1862
    %v1864 = vpop.f32.mrb[0].mxu0
    %v1865 = vpop.f32.mrb[0].mxu0
    %v1866 = vadd.f32 %v672, %v1865
    %v1867 = vpop.f32.mrb[0].mxu0
    %1868 = vmatprep.mubr.bf16.mxu0 0
    %1869 = vmatmul.mubr.bf16.gmra.mrb[0].mxu0 %v1757
    %v1870 = vpop.f32.mrb[0].mxu0
    %v1871 = vadd.f32 %v672, %v1870
    %v1872 = vpop.f32.mrb[0].mxu0
    %v1873 = vpop.f32.mrb[0].mxu0
    %v1874 = vadd.f32 %v672, %v1873
    %v1875 = vpop.f32.mrb[0].mxu0
    %1876 = vmatprep.mubr.bf16.mxu0 0
    %1877 = vmatmul.mubr.bf16.gmra.mrb[0].mxu0 %v1758
    %v1878 = vpop.f32.mrb[0].mxu0
    %v1879 = vadd.f32 %v672, %v1878
    %v1880 = vpop.f32.mrb[0].mxu0
    %v1881 = vpop.f32.mrb[0].mxu0
    %v1882 = vadd.f32 %v672, %v1881
    %v1883 = vpop.f32.mrb[0].mxu0
    %1884 = vmatprep.mubr.bf16.mxu0 0
    %1885 = vmatmul.mubr.bf16.gmra.mrb[0].mxu0 %v1759
    %v1886 = vpop.f32.mrb[0].mxu0
    %v1887 = vadd.f32 %v672, %v1886
    %v1888 = vpop.f32.mrb[0].mxu0
    %v1889 = vpop.f32.mrb[0].mxu0
    %v1890 = vadd.f32 %v672, %v1889
    %v1891 = vpop.f32.mrb[0].mxu0
    %1892 = vmatprep.mubr.bf16.mxu0 0
    %1893 = vmatmul.mubr.bf16.gmra.mrb[0].mxu0 %v1760
    %v1894 = vpop.f32.mrb[0].mxu0
    %v1895 = vadd.f32 %v672, %v1894
    %v1896 = vpop.f32.mrb[0].mxu0
    %v1897 = vpop.f32.mrb[0].mxu0
    %v1898 = vadd.f32 %v672, %v1897
    %v1899 = vpop.f32.mrb[0].mxu0
    %1900 = vmatprep.mubr.bf16.mxu0 0
    %1901 = vmatmul.mubr.bf16.gmra.mrb[0].mxu0 %v1761
    %v1902 = vpop.f32.mrb[0].mxu0
    %v1903 = vadd.f32 %v672, %v1902
    %v1904 = vpop.f32.mrb[0].mxu0
    %v1905 = vpop.f32.mrb[0].mxu0
    %v1906 = vadd.f32 %v672, %v1905
    %v1907 = vpop.f32.mrb[0].mxu0
    %1908 = vmatprep.mubr.bf16.mxu0 0
    %1909 = vmatmul.mubr.bf16.gmra.mrb[0].mxu0 %v1762
    %v1910 = vpop.f32.mrb[0].mxu0
    %v1911 = vadd.f32 %v672, %v1910
    %v1912 = vpop.f32.mrb[0].mxu0
    %v1913 = vpop.f32.mrb[0].mxu0
    %v1914 = vadd.f32 %v672, %v1913
    %v1915 = vpop.f32.mrb[0].mxu0
    %1916 = vmatprep.mubr.bf16.mxu0 0
    %1917 = vmatmul.mubr.bf16.gmra.mrb[0].mxu0 %v1763
    %v1918 = vpop.f32.mrb[0].mxu0
    %v1919 = vadd.f32 %v672, %v1918
    %v1920 = vpop.f32.mrb[0].mxu0
    %v1921 = vpop.f32.mrb[0].mxu0
    %v1922 = vadd.f32 %v672, %v1921
    %v1923 = vpop.f32.mrb[0].mxu0
    %1924 = vdwg.mxu0
    %v1925 = vmul.f32 %v1799, %v1799
    %v1926 = vmul.f32 %v1802, %v1802
    %v1927 = vmul.f32 %v1807, %v1807
    %v1928 = vmul.f32 %v1810, %v1810
    %v1929 = vmul.f32 %v1815, %v1815
    %v1930 = vmul.f32 %v1818, %v1818
    %v1931 = vmul.f32 %v1823, %v1823
    %v1932 = vmul.f32 %v1826, %v1826
    %v1933 = vmul.f32 %v1831, %v1831
    %v1934 = vmul.f32 %v1834, %v1834
    %v1935 = vmul.f32 %v1839, %v1839
    %v1936 = vmul.f32 %v1842, %v1842
    %v1937 = vmul.f32 %v1847, %v1847
    %v1938 = vmul.f32 %v1850, %v1850
    %v1939 = vmul.f32 %v1855, %v1855
    %v1940 = vmul.f32 %v1858, %v1858
    %v1941 = vmul.f32 %v1863, %v1863
    %v1942 = vmul.f32 %v1866, %v1866
    %v1943 = vmul.f32 %v1871, %v1871
    %v1944 = vmul.f32 %v1874, %v1874
    %v1945 = vmul.f32 %v1879, %v1879
    %v1946 = vmul.f32 %v1882, %v1882
    %v1947 = vmul.f32 %v1887, %v1887
    %v1948 = vmul.f32 %v1890, %v1890
    %v1949 = vmul.f32 %v1895, %v1895
    %v1950 = vmul.f32 %v1898, %v1898
    %v1951 = vmul.f32 %v1903, %v1903
    %v1952 = vmul.f32 %v1906, %v1906
    %v1953 = vmul.f32 %v1911, %v1911
    %v1954 = vmul.f32 %v1914, %v1914
    %v1955 = vmul.f32 %v1919, %v1919
    %v1956 = vmul.f32 %v1922, %v1922
    %1957 = vadd.xlane.f32.xlu0 %v1925
    %v1958 = vpop.xlane.xlu0 %1957
    %1959 = vadd.xlane.f32.xlu0 %v1926
    %v1960 = vpop.xlane.xlu0 %1959
    %1961 = vadd.xlane.f32.xlu0 %v1927
    %v1962 = vpop.xlane.xlu0 %1961
    %1963 = vadd.xlane.f32.xlu0 %v1928
    %v1964 = vpop.xlane.xlu0 %1963
    %1965 = vadd.xlane.f32.xlu0 %v1929
    %v1966 = vpop.xlane.xlu0 %1965
    %1967 = vadd.xlane.f32.xlu0 %v1930
    %v1968 = vpop.xlane.xlu0 %1967
    %1969 = vadd.xlane.f32.xlu0 %v1931
    %v1970 = vpop.xlane.xlu0 %1969
    %1971 = vadd.xlane.f32.xlu0 %v1932
    %v1972 = vpop.xlane.xlu0 %1971
    %1973 = vadd.xlane.f32.xlu0 %v1933
    %v1974 = vpop.xlane.xlu0 %1973
    %1975 = vadd.xlane.f32.xlu0 %v1934
    %v1976 = vpop.xlane.xlu0 %1975
    %1977 = vadd.xlane.f32.xlu0 %v1935
    %v1978 = vpop.xlane.xlu0 %1977
    %1979 = vadd.xlane.f32.xlu0 %v1936
    %v1980 = vpop.xlane.xlu0 %1979
    %1981 = vadd.xlane.f32.xlu0 %v1937
    %v1982 = vpop.xlane.xlu0 %1981
    %1983 = vadd.xlane.f32.xlu0 %v1938
    %v1984 = vpop.xlane.xlu0 %1983
    %1985 = vadd.xlane.f32.xlu0 %v1939
    %v1986 = vpop.xlane.xlu0 %1985
    %1987 = vadd.xlane.f32.xlu0 %v1940
    %v1988 = vpop.xlane.xlu0 %1987
    %1989 = vadd.xlane.f32.xlu0 %v1941
    %v1990 = vpop.xlane.xlu0 %1989
    %1991 = vadd.xlane.f32.xlu0 %v1942
    %v1992 = vpop.xlane.xlu0 %1991
    %1993 = vadd.xlane.f32.xlu0 %v1943
    %v1994 = vpop.xlane.xlu0 %1993
    %1995 = vadd.xlane.f32.xlu0 %v1944
    %v1996 = vpop.xlane.xlu0 %1995
    %1997 = vadd.xlane.f32.xlu0 %v1945
    %v1998 = vpop.xlane.xlu0 %1997
    %1999 = vadd.xlane.f32.xlu0 %v1946
    %v2000 = vpop.xlane.xlu0 %1999
    %2001 = vadd.xlane.f32.xlu0 %v1947
    %v2002 = vpop.xlane.xlu0 %2001
    %2003 = vadd.xlane.f32.xlu0 %v1948
    %v2004 = vpop.xlane.xlu0 %2003
    %2005 = vadd.xlane.f32.xlu0 %v1949
    %v2006 = vpop.xlane.xlu0 %2005
    %2007 = vadd.xlane.f32.xlu0 %v1950
    %v2008 = vpop.xlane.xlu0 %2007
    %2009 = vadd.xlane.f32.xlu0 %v1951
    %v2010 = vpop.xlane.xlu0 %2009
    %2011 = vadd.xlane.f32.xlu0 %v1952
    %v2012 = vpop.xlane.xlu0 %2011
    %2013 = vadd.xlane.f32.xlu0 %v1953
    %v2014 = vpop.xlane.xlu0 %2013
    %2015 = vadd.xlane.f32.xlu0 %v1954
    %v2016 = vpop.xlane.xlu0 %2015
    %2017 = vadd.xlane.f32.xlu0 %v1955
    %v2018 = vpop.xlane.xlu0 %2017
    %2019 = vadd.xlane.f32.xlu0 %v1956
    %v2020 = vpop.xlane.xlu0 %2019
    %v2021 = vadd.f32 %v1958, 1e-12
    %v2022 = vadd.f32 %v1960, 1e-12
    %v2023 = vadd.f32 %v1962, 1e-12
    %v2024 = vadd.f32 %v1964, 1e-12
    %v2025 = vadd.f32 %v1966, 1e-12
    %v2026 = vadd.f32 %v1968, 1e-12
    %v2027 = vadd.f32 %v1970, 1e-12
    %v2028 = vadd.f32 %v1972, 1e-12
    %v2029 = vadd.f32 %v1974, 1e-12
    %v2030 = vadd.f32 %v1976, 1e-12
    %v2031 = vadd.f32 %v1978, 1e-12
    %v2032 = vadd.f32 %v1980, 1e-12
    %v2033 = vadd.f32 %v1982, 1e-12
    %v2034 = vadd.f32 %v1984, 1e-12
    %v2035 = vadd.f32 %v1986, 1e-12
    %v2036 = vadd.f32 %v1988, 1e-12
    %v2037 = vadd.f32 %v1990, 1e-12
    %v2038 = vadd.f32 %v1992, 1e-12
    %v2039 = vadd.f32 %v1994, 1e-12
    %v2040 = vadd.f32 %v1996, 1e-12
    %v2041 = vadd.f32 %v1998, 1e-12
    %v2042 = vadd.f32 %v2000, 1e-12
    %v2043 = vadd.f32 %v2002, 1e-12
    %v2044 = vadd.f32 %v2004, 1e-12
    %v2045 = vadd.f32 %v2006, 1e-12
    %v2046 = vadd.f32 %v2008, 1e-12
    %v2047 = vadd.f32 %v2010, 1e-12
    %v2048 = vadd.f32 %v2012, 1e-12
    %v2049 = vadd.f32 %v2014, 1e-12
    %v2050 = vadd.f32 %v2016, 1e-12
    %v2051 = vadd.f32 %v2018, 1e-12
    %v2052 = vadd.f32 %v2020, 1e-12
    %v2053 = vrsqrt.pop %v2021
    %v2054 = vrsqrt.pop %v2022
    %v2055 = vrsqrt.pop %v2023
    %v2056 = vrsqrt.pop %v2024
    %v2057 = vrsqrt.pop %v2025
    %v2058 = vrsqrt.pop %v2026
    %v2059 = vrsqrt.pop %v2027
    %v2060 = vrsqrt.pop %v2028
    %v2061 = vrsqrt.pop %v2029
    %v2062 = vrsqrt.pop %v2030
    %v2063 = vrsqrt.pop %v2031
    %v2064 = vrsqrt.pop %v2032
    %v2065 = vrsqrt.pop %v2033
    %v2066 = vrsqrt.pop %v2034
    %v2067 = vrsqrt.pop %v2035
    %v2068 = vrsqrt.pop %v2036
    %v2069 = vrsqrt.pop %v2037
    %v2070 = vrsqrt.pop %v2038
    %v2071 = vrsqrt.pop %v2039
    %v2072 = vrsqrt.pop %v2040
    %v2073 = vrsqrt.pop %v2041
    %v2074 = vrsqrt.pop %v2042
    %v2075 = vrsqrt.pop %v2043
    %v2076 = vrsqrt.pop %v2044
    %v2077 = vrsqrt.pop %v2045
    %v2078 = vrsqrt.pop %v2046
    %v2079 = vrsqrt.pop %v2047
    %v2080 = vrsqrt.pop %v2048
    %v2081 = vrsqrt.pop %v2049
    %v2082 = vrsqrt.pop %v2050
    %v2083 = vrsqrt.pop %v2051
    %v2084 = vrsqrt.pop %v2052
    %v2085 = vmul.f32 %v2053, 1.118034
    %v2086 = vmul.f32 %v2054, 1.118034
    %v2087 = vmul.f32 %v2055, 1.118034
    %v2088 = vmul.f32 %v2056, 1.118034
    %v2089 = vmul.f32 %v2057, 1.118034
    %v2090 = vmul.f32 %v2058, 1.118034
    %v2091 = vmul.f32 %v2059, 1.118034
    %v2092 = vmul.f32 %v2060, 1.118034
    %v2093 = vmul.f32 %v2061, 1.118034
    %v2094 = vmul.f32 %v2062, 1.118034
    %v2095 = vmul.f32 %v2063, 1.118034
    %v2096 = vmul.f32 %v2064, 1.118034
    %v2097 = vmul.f32 %v2065, 1.118034
    %v2098 = vmul.f32 %v2066, 1.118034
    %v2099 = vmul.f32 %v2067, 1.118034
    %v2100 = vmul.f32 %v2068, 1.118034
    %v2101 = vmul.f32 %v2069, 1.118034
    %v2102 = vmul.f32 %v2070, 1.118034
    %v2103 = vmul.f32 %v2071, 1.118034
    %v2104 = vmul.f32 %v2072, 1.118034
    %v2105 = vmul.f32 %v2073, 1.118034
    %v2106 = vmul.f32 %v2074, 1.118034
    %v2107 = vmul.f32 %v2075, 1.118034
    %v2108 = vmul.f32 %v2076, 1.118034
    %v2109 = vmul.f32 %v2077, 1.118034
    %v2110 = vmul.f32 %v2078, 1.118034
    %v2111 = vmul.f32 %v2079, 1.118034
    %v2112 = vmul.f32 %v2080, 1.118034
    %v2113 = vmul.f32 %v2081, 1.118034
    %v2114 = vmul.f32 %v2082, 1.118034
    %v2115 = vmul.f32 %v2083, 1.118034
    %v2116 = vmul.f32 %v2084, 1.118034
    %v2117 = vmul.f32 %v1799, %v2085
    %v2118 = vmul.f32 %v1802, %v2086
    %v2119 = vmul.f32 %v1807, %v2087
    %v2120 = vmul.f32 %v1810, %v2088
    %v2121 = vmul.f32 %v1815, %v2089
    %v2122 = vmul.f32 %v1818, %v2090
    %v2123 = vmul.f32 %v1823, %v2091
    %v2124 = vmul.f32 %v1826, %v2092
    %v2125 = vmul.f32 %v1831, %v2093
    %v2126 = vmul.f32 %v1834, %v2094
    %v2127 = vmul.f32 %v1839, %v2095
    %v2128 = vmul.f32 %v1842, %v2096
    %v2129 = vmul.f32 %v1847, %v2097
    %v2130 = vmul.f32 %v1850, %v2098
    %v2131 = vmul.f32 %v1855, %v2099
    %v2132 = vmul.f32 %v1858, %v2100
    %v2133 = vmul.f32 %v1863, %v2101
    %v2134 = vmul.f32 %v1866, %v2102
    %v2135 = vmul.f32 %v1871, %v2103
    %v2136 = vmul.f32 %v1874, %v2104
    %v2137 = vmul.f32 %v1879, %v2105
    %v2138 = vmul.f32 %v1882, %v2106
    %v2139 = vmul.f32 %v1887, %v2107
    %v2140 = vmul.f32 %v1890, %v2108
    %v2141 = vmul.f32 %v1895, %v2109
    %v2142 = vmul.f32 %v1898, %v2110
    %v2143 = vmul.f32 %v1903, %v2111
    %v2144 = vmul.f32 %v1906, %v2112
    %v2145 = vmul.f32 %v1911, %v2113
    %v2146 = vmul.f32 %v1914, %v2114
    %v2147 = vmul.f32 %v1919, %v2115
    %v2148 = vmul.f32 %v1922, %v2116
    %v2149 = vpack.c.bf16 %v2118, %v2117
    %v2150 = vpack.c.bf16 %v2120, %v2119
    %v2151 = vpack.c.bf16 %v2122, %v2121
    %v2152 = vpack.c.bf16 %v2124, %v2123
    %v2153 = vpack.c.bf16 %v2126, %v2125
    %v2154 = vpack.c.bf16 %v2128, %v2127
    %v2155 = vpack.c.bf16 %v2130, %v2129
    %v2156 = vpack.c.bf16 %v2132, %v2131
    %v2157 = vpack.c.bf16 %v2134, %v2133
    %v2158 = vpack.c.bf16 %v2136, %v2135
    %v2159 = vpack.c.bf16 %v2138, %v2137
    %v2160 = vpack.c.bf16 %v2140, %v2139
    %v2161 = vpack.c.bf16 %v2142, %v2141
    %v2162 = vpack.c.bf16 %v2144, %v2143
    %v2163 = vpack.c.bf16 %v2146, %v2145
    %v2164 = vpack.c.bf16 %v2148, %v2147
    %v2181 = vunpack.c.l.b16 %v2149
    %v2182 = vunpack.c.h.b16 %v2149
    %v2183 = vunpack.c.l.b16 %v2150
    %v2184 = vunpack.c.h.b16 %v2150
    %v2185 = vunpack.c.l.b16 %v2151
    %v2186 = vunpack.c.h.b16 %v2151
    %v2187 = vunpack.c.l.b16 %v2152
    %v2188 = vunpack.c.h.b16 %v2152
    %v2189 = vunpack.c.l.b16 %v2153
    %v2190 = vunpack.c.h.b16 %v2153
    %v2191 = vunpack.c.l.b16 %v2154
    %v2192 = vunpack.c.h.b16 %v2154
    %v2193 = vunpack.c.l.b16 %v2155
    %v2194 = vunpack.c.h.b16 %v2155
    %v2195 = vunpack.c.l.b16 %v2156
    %v2196 = vunpack.c.h.b16 %v2156
    %v2197 = vunpack.c.l.b16 %v2157
    %v2198 = vunpack.c.h.b16 %v2157
    %v2199 = vunpack.c.l.b16 %v2158
    %v2200 = vunpack.c.h.b16 %v2158
    %v2201 = vunpack.c.l.b16 %v2159
    %v2202 = vunpack.c.h.b16 %v2159
    %v2203 = vunpack.c.l.b16 %v2160
    %v2204 = vunpack.c.h.b16 %v2160
    %v2205 = vunpack.c.l.b16 %v2161
    %v2206 = vunpack.c.h.b16 %v2161
    %v2207 = vunpack.c.l.b16 %v2162
    %v2208 = vunpack.c.h.b16 %v2162
    %v2209 = vunpack.c.l.b16 %v2163
    %v2210 = vunpack.c.h.b16 %v2163
    %v2211 = vunpack.c.l.b16 %v2164
    %v2212 = vunpack.c.h.b16 %v2164
    %v2213 = vpack.c.b16 %v2181, %v2181
    %v2214 = vpack.c.b16 %v2182, %v2182
    %v2215 = vpack.c.b16 %v2183, %v2183
    %v2216 = vpack.c.b16 %v2184, %v2184
    %v2217 = vpack.c.b16 %v2185, %v2185
    %v2218 = vpack.c.b16 %v2186, %v2186
    %v2219 = vpack.c.b16 %v2187, %v2187
    %v2220 = vpack.c.b16 %v2188, %v2188
    %v2221 = vpack.c.b16 %v2189, %v2189
    %v2222 = vpack.c.b16 %v2190, %v2190
    %v2223 = vpack.c.b16 %v2191, %v2191
    %v2224 = vpack.c.b16 %v2192, %v2192
    %v2225 = vpack.c.b16 %v2193, %v2193
    %v2226 = vpack.c.b16 %v2194, %v2194
    %v2227 = vpack.c.b16 %v2195, %v2195
    %v2228 = vpack.c.b16 %v2196, %v2196
    %v2229 = vpack.c.b16 %v2197, %v2197
    %v2230 = vpack.c.b16 %v2198, %v2198
    %v2231 = vpack.c.b16 %v2199, %v2199
    %v2232 = vpack.c.b16 %v2200, %v2200
    %v2233 = vpack.c.b16 %v2201, %v2201
    %v2234 = vpack.c.b16 %v2202, %v2202
    %v2235 = vpack.c.b16 %v2203, %v2203
    %v2236 = vpack.c.b16 %v2204, %v2204
    %v2237 = vpack.c.b16 %v2205, %v2205
    %v2238 = vpack.c.b16 %v2206, %v2206
    %v2239 = vpack.c.b16 %v2207, %v2207
    %v2240 = vpack.c.b16 %v2208, %v2208
    %v2241 = vpack.c.b16 %v2209, %v2209
    %v2242 = vpack.c.b16 %v2210, %v2210
    %v2243 = vpack.c.b16 %v2211, %v2211
    %v2244 = vpack.c.b16 %v2212, %v2212
    %2277 = vst [vmem:[#allocation11] sm:$0xf] %v2213
    %2278 = vst [vmem:[#allocation11 + $0x4] sm:$0xf] %v2214
    %2279 = vst [vmem:[#allocation11 + $0x8] sm:$0xf] %v2215
    %2280 = vst [vmem:[#allocation11 + $0xc] sm:$0xf] %v2216
    %2281 = vst [vmem:[#allocation11 + $0x10] sm:$0xf] %v2217
    %2282 = vst [vmem:[#allocation11 + $0x14] sm:$0xf] %v2218
    %2283 = vst [vmem:[#allocation11 + $0x18] sm:$0xf] %v2219
    %2284 = vst [vmem:[#allocation11 + $0x1c] sm:$0xf] %v2220
    %2285 = vst [vmem:[#allocation11 + $0x20] sm:$0xf] %v2221
    %2286 = vst [vmem:[#allocation11 + $0x24] sm:$0xf] %v2222
    %2287 = vst [vmem:[#allocation11 + $0x28] sm:$0xf] %v2223
    %2288 = vst [vmem:[#allocation11 + $0x2c] sm:$0xf] %v2224
    %2289 = vst [vmem:[#allocation11 + $0x30] sm:$0xf] %v2225
    %2290 = vst [vmem:[#allocation11 + $0x34] sm:$0xf] %v2226
    %2291 = vst [vmem:[#allocation11 + $0x38] sm:$0xf] %v2227
    %2292 = vst [vmem:[#allocation11 + $0x3c] sm:$0xf] %v2228
    %2293 = vst [vmem:[#allocation11 + $0x40] sm:$0xf] %v2229
    %2294 = vst [vmem:[#allocation11 + $0x44] sm:$0xf] %v2230
    %2295 = vst [vmem:[#allocation11 + $0x48] sm:$0xf] %v2231
    %2296 = vst [vmem:[#allocation11 + $0x4c] sm:$0xf] %v2232
    %2297 = vst [vmem:[#allocation11 + $0x50] sm:$0xf] %v2233
    %2298 = vst [vmem:[#allocation11 + $0x54] sm:$0xf] %v2234
    %2299 = vst [vmem:[#allocation11 + $0x58] sm:$0xf] %v2235
    %2300 = vst [vmem:[#allocation11 + $0x5c] sm:$0xf] %v2236
    %2301 = vst [vmem:[#allocation11 + $0x60] sm:$0xf] %v2237
    %2302 = vst [vmem:[#allocation11 + $0x64] sm:$0xf] %v2238
    %2303 = vst [vmem:[#allocation11 + $0x68] sm:$0xf] %v2239
    %2304 = vst [vmem:[#allocation11 + $0x6c] sm:$0xf] %v2240
    %2305 = vst [vmem:[#allocation11 + $0x70] sm:$0xf] %v2241
    %2306 = vst [vmem:[#allocation11 + $0x74] sm:$0xf] %v2242
    %2307 = vst [vmem:[#allocation11 + $0x78] sm:$0xf] %v2243
    %2308 = vst [vmem:[#allocation11 + $0x7c] sm:$0xf] %v2244
    // Predicated region
    $region42: #{tpu_custom_call.1} parent=1 // pred_check
      _
    $region43: #{tpu_custom_call.1} parent=1 // pred_check_branch
      %2310 = sbr.rel (0) target = $region45
    $region44: #{tpu_custom_call.1} parent=1 // pred_region
      %s2312 = ssub.s32 2048, 2048
      %2313 = vsyncadd [#allocation4], %s2312
      %s2314 = sshll.u32 [#allocation10], 4
      %s2315 = int_to_ptr.vmem [resolvable:$true] %s2314
      %2320 = dma.vmem_to_hbm [thread:$0]  %s2315, 2048, %s6, [#allocation4], 64, 64, 4
    $region45: #{tpu_custom_call.1} parent=1 // pred_fallthru
      _
    // Predicated region
    $region46: #{tpu_custom_call.1} parent=1 // pred_check
      _
    $region47: #{tpu_custom_call.1} parent=1 // pred_check_branch
      %2322 = sbr.rel (0) target = $region49
    $region48: #{tpu_custom_call.1} parent=1 // pred_region
      %s2324 = ssub.s32 2048, 2048
      %2325 = vsyncadd [#allocation12], %s2324
      %s2326 = sshll.u32 [#allocation11], 4
      %s2327 = int_to_ptr.vmem [resolvable:$true] %s2326
      %2332 = dma.vmem_to_hbm [thread:$0]  %s2327, 2048, %s7, [#allocation12], 64, 64, 4
    $region49: #{tpu_custom_call.1} parent=1 // pred_fallthru
      _
    // Predicated region
    $region50: #{tpu_custom_call.1} parent=1 // pred_check
      _
    $region51: #{tpu_custom_call.1} parent=1 // pred_check_branch
      %2334 = sbr.rel (0) target = $region53
    $region52: #{tpu_custom_call.1} parent=1 // pred_region
      %2335 = dma.done [#allocation4], 2048
    $region53: #{tpu_custom_call.1} parent=1 // pred_fallthru
      _
    // Predicated region
    $region54: #{tpu_custom_call.1} parent=1 // pred_check
      _
    $region55: #{tpu_custom_call.1} parent=1 // pred_check_branch
      %2337 = sbr.rel (0) target = $region57
    $region56: #{tpu_custom_call.1} parent=1 // pred_region
      %2338 = dma.done [#allocation12], 2048
    $region57: #{tpu_custom_call.1} parent=1 // pred_fallthru
      _
    %2339 = vsyncpa [#allocation3], 1
    %2340 = vsyncpa [#allocation6], 1
    %2341 = vsyncpa [#allocation9], 1
    %2342 = vsyncpa [#allocation4], 1
    %2343 = vsyncpa [#allocation12], 1

</llo_original>
